<compile_context>
chip_gen: v7x
topology: tpu7x:2x2x1
jax: 0.10.0
libtpu: 0.0.40
codegen_flags: <defaults>
</compile_context>

<pallas_src>
import functools
import math

import jax
import jax.numpy as jnp
from jax.experimental import pallas as pl
from jax.experimental.pallas import tpu as pltpu

_LANES = 128
_CLAMP_MIN = 1e-12
_CLAMP_MAX = 1e12


def _center_loss_kernel(labels_ref, x_ref, centers_hbm, out_ref, cbuf, sems,
                        *, tb, dp, tiles_per_split, row_block):
    """One grid step processes one batch tile of `tb` samples.

    Grid = (n_splits, tiles_per_split):
      axis 0 ("parallel")  — independent batch splits (megacore-shardable),
      axis 1 ("arbitrary") — sequential tiles; the gather is double-buffered
                             along this axis and primed at t == 0 per split.

    labels_ref : SMEM (Bp,)      int32  -- scalar-prefetched labels
    x_ref      : VMEM (tb, dp)          -- feature tile (auto-pipelined)
    centers_hbm: ANY  (C, dp)           -- raw HBM ref, rows gathered manually
    out_ref    : VMEM (tb, 128)  f32    -- per-sample / per-lane partial sums
    cbuf       : VMEM (2, tb, dp)       -- double-buffered gathered center rows
    sems       : DMA semaphores (2,)    -- one shared semaphore per slot
    """
    s = pl.program_id(0)
    t = pl.program_id(1)
    tile = s * tiles_per_split + t
    slot = t % 2

    def start_gather(tile_idx, slot_idx):
        base = tile_idx * tb
        for r in range(tb):
            lbl = labels_ref[base + r]
            pltpu.make_async_copy(
                centers_hbm.at[pl.ds(lbl, 1), :],
                cbuf.at[slot_idx, pl.ds(r, 1), :],
                sems.at[slot_idx],
            ).start()

    def wait_gather(slot_idx):
        # All tb row copies of this slot signalled the same semaphore; issue
        # one shape-matched wait per copy (dummy src, same pattern as the
        # official paged-attention kernel's MultiPageAsyncCopyDescriptor).
        for r in range(tb):
            pltpu.make_async_copy(
                centers_hbm.at[pl.ds(0, 1), :],          # dummy, shape-matched
                cbuf.at[slot_idx, pl.ds(r, 1), :],
                sems.at[slot_idx],
            ).wait()

    # Prime this split's gather pipeline on its first tile.
    @pl.when(t == 0)
    def _():
        start_gather(tile, 0)

    # Look-ahead: start gathering the NEXT tile's centers into the other slot
    # before waiting, so the gather overlaps this tile's compute and the
    # auto-pipelined x prefetch.
    if tiles_per_split > 1:
        @pl.when(t + 1 < tiles_per_split)
        def _():
            start_gather(tile + 1, 1 - slot)

    wait_gather(slot)

    # Fused, chunked squared distance: never materialize the (tb, dp) diff.
    # Work in (row_block, 128) chunks so live vregs stay bounded however big
    # the batch tile is; the final 128-lane reduction happens in the wrapper.
    cview = cbuf.at[slot]
    n_chunks = dp // _LANES
    for r0 in range(0, tb, row_block):
        acc = None
        for k in range(n_chunks):
            c0 = k * _LANES
            xd = x_ref[r0:r0 + row_block, c0:c0 + _LANES].astype(jnp.float32)
            cd = cview[r0:r0 + row_block, c0:c0 + _LANES].astype(jnp.float32)
            d = xd - cd
            acc = d * d if acc is None else acc + d * d
        out_ref[r0:r0 + row_block, :] = acc


def _pick_tb(batch, dp, x_bytes, c_bytes):
    """Largest batch tile (multiple of 8, <= 256) whose VMEM footprint
    (2x-buffered x tile + 2x-buffered gathered centers + output) stays well
    inside the most restrictive default scoped-VMEM limit (v5e: 16 MiB)."""
    budget = 10 * 1024 * 1024
    per_sample = dp * (2 * x_bytes + 2 * c_bytes) + 2 * _LANES * 4
    tb = budget // per_sample
    tb = int(max(8, min(256, (tb // 8) * 8)))
    # No point tiling wider than the (8-padded) batch.
    tb = min(tb, ((batch + 7) // 8) * 8)
    return max(8, tb)


@functools.partial(jax.jit, static_argnames=("tb",))
def center_loss(x, centers, labels, *, tb=None):
    """CenterLoss forward: mean_i clamp(||x_i - centers[labels_i]||^2) + const.

    Matches the PyTorch module's clamp-then-sum semantics exactly (including
    the B*(C-1) masked-out zeros that are clamped up to 1e-12).
    """
    B, D = x.shape
    C, Dc = centers.shape
    assert D == Dc, "feature dim mismatch between x and centers"

    # Keep float inputs in their native dtype (upcast per chunk in-kernel);
    # only non-float inputs are cast here.
    if not jnp.issubdtype(x.dtype, jnp.floating):
        x = x.astype(jnp.float32)
    if not jnp.issubdtype(centers.dtype, jnp.floating):
        centers = centers.astype(jnp.float32)
    labels_i32 = labels.astype(jnp.int32)

    # Pad feature dim to the 128-lane grain only when needed (zero padding is
    # distance-neutral).  Default feat_dim=2048 needs no pad.
    d_pad = (-D) % _LANES
    if d_pad:
        x = jnp.pad(x, ((0, 0), (0, d_pad)))
        centers = jnp.pad(centers, ((0, 0), (0, d_pad)))
    Dp = D + d_pad

    if tb is None:
        tb = _pick_tb(B, Dp, x.dtype.itemsize, centers.dtype.itemsize)
    assert tb % 8 == 0, "batch tile must be a multiple of 8 sublanes"

    # Grid layout: >=2 batch splits when possible so v7x's two TensorCores can
    # each take an independent half of the grid; the gather-prefetch chain
    # lives on the sequential inner axis.
    n_tiles = -(-B // tb)
    n_splits = 2 if n_tiles >= 2 else 1
    tiles_per_split = -(-n_tiles // n_splits)
    Bp = n_splits * tiles_per_split * tb

    b_pad = Bp - B
    if b_pad:
        x = jnp.pad(x, ((0, b_pad), (0, 0)))
        labels_i32 = jnp.pad(labels_i32, (0, b_pad))

    row_block = math.gcd(tb, 64)   # keeps live vregs bounded in the chunk loop

    kernel = functools.partial(
        _center_loss_kernel, tb=tb, dp=Dp,
        tiles_per_split=tiles_per_split, row_block=row_block)

    def tile_map(s, t, labels):   # labels = scalar-prefetch ref (unused here)
        return (s * tiles_per_split + t, 0)

    lane_partials = pl.pallas_call(
        kernel,
        out_shape=jax.ShapeDtypeStruct((Bp, _LANES), jnp.float32),
        grid_spec=pltpu.PrefetchScalarGridSpec(
            num_scalar_prefetch=1,                       # labels -> SMEM
            grid=(n_splits, tiles_per_split),
            in_specs=[
                pl.BlockSpec((tb, Dp), tile_map),        # x tiles (auto-pipelined)
                pl.BlockSpec(memory_space=pl.ANY),       # centers stay in HBM
            ],
            out_specs=pl.BlockSpec((tb, _LANES), tile_map),
            scratch_shapes=[
                pltpu.VMEM((2, tb, Dp), centers.dtype),  # double-buffered gather
                pltpu.SemaphoreType.DMA((2,)),           # one shared sem per slot
            ],
        ),
        compiler_params=pltpu.CompilerParams(
            dimension_semantics=("parallel", "arbitrary"),
        ),
        cost_estimate=pl.CostEstimate(
            flops=3 * Bp * Dp,
            transcendentals=0,
            bytes_accessed=(Bp * Dp * (x.dtype.itemsize + centers.dtype.itemsize)
                            + Bp * _LANES * 4 + Bp * 4),
        ),
    )(labels_i32, x, centers)

    # Tiny epilogue: lane reduce, per-sample clamp, PyTorch's clamped-zeros
    # constant, mean over the (unpadded) batch.
    per_sample = jnp.sum(lane_partials[:B], axis=1)
    per_sample = jnp.clip(per_sample, _CLAMP_MIN, _CLAMP_MAX)
    clamped_zeros = jnp.float32(B) * jnp.float32(C - 1) * jnp.float32(_CLAMP_MIN)
    return (jnp.sum(per_sample) + clamped_zeros) / jnp.float32(B)


def _reference_center_loss(x, centers, labels):
    # Pure-JAX reference mirroring the PyTorch module exactly.
    B = x.shape[0]
    C = centers.shape[0]
    distmat = (
        jnp.sum(x ** 2, axis=1, keepdims=True)
        + jnp.sum(centers ** 2, axis=1, keepdims=True).T
        - 2.0 * x @ centers.T
    )
    classes = jnp.arange(C)
    mask = (labels[:, None] == classes[None, :]).astype(jnp.float32)
    dist = jnp.clip(distmat * mask, _CLAMP_MIN, _CLAMP_MAX)
    return jnp.sum(dist) / B


if __name__ == "__main__":
    # Small deterministic shapes (module default feat_dim is 2048; 256 keeps
    # the demo small while exercising the multi-chunk compute loop; batch=24
    # exercises the adaptive-tile, split-grid and batch-padding paths).
    batch = 24
    feat_dim = 256
    num_classes = 32

    key = jax.random.PRNGKey(0)
    k_x, k_c, k_l = jax.random.split(key, 3)

    x = jax.random.normal(k_x, (batch, feat_dim), dtype=jnp.float32)
    centers = jax.random.normal(k_c, (num_classes, feat_dim), dtype=jnp.float32)
    labels = jax.random.randint(k_l, (batch,), 0, num_classes, dtype=jnp.int32)

    ref = _reference_center_loss(x, centers, labels)

    # Default adaptive tile (single tile covering the whole batch here).
    loss = center_loss(x, centers, labels)
    jax.block_until_ready(loss)
    assert jnp.allclose(loss, ref, rtol=1e-4, atol=1e-4), (loss, ref)

    # Small explicit tile: exercises the 2-way "parallel" split, the
    # double-buffered gather look-ahead and the padded tail tile.
    loss_small = center_loss(x, centers, labels, tb=8)
    jax.block_until_ready(loss_small)
    assert jnp.allclose(loss_small, ref, rtol=1e-4, atol=1e-4), (loss_small, ref)

    print("KERNEL_OK")
</pallas_src>

<mosaic_0001>
module attributes {stable_mosaic.version = 11 : i64} {
  func.func @_center_loss_kernel(%arg0: i32, %arg1: i32, %arg2: memref<24xi32, #tpu.memory_space<smem>>, %arg3: memref<24x256xf32, #tpu.memory_space<vmem>>, %arg4: memref<32x256xf32, #tpu.memory_space<any>>, %arg5: memref<24x128xf32, #tpu.memory_space<vmem>>, %arg6: memref<2x24x256xf32, #tpu.memory_space<vmem>>, %arg7: memref<2x!tpu.dma_semaphore, #tpu.memory_space<semaphore_mem>>) attributes {dimension_semantics = [#tpu.dimension_semantics<parallel>, #tpu.dimension_semantics<arbitrary>], iteration_bounds = array<i64: 1, 1>, scalar_prefetch = 1 : i64, scratch_operands = 2 : i64, tpu.core_type = #tpu.core_type<tc>, window_params = [{transform_indices = @transform_0, window_bounds = array<i64: 24, 256>}, {}, {transform_indices = @transform_2, window_bounds = array<i64: 24, 128>}]} {
    %c1_i32 = arith.constant 1 : i32
    %0 = arith.muli %arg0, %c1_i32 : i32
    %1 = arith.addi %0, %arg1 : i32
    %c2_i32 = arith.constant 2 : i32
    %c0_i32 = arith.constant 0 : i32
    %2 = arith.cmpi eq, %c2_i32, %c0_i32 : i32
    %c1_i32_0 = arith.constant 1 : i32
    %3 = arith.select %2, %c1_i32_0, %c2_i32 : i32
    %4 = arith.remsi %arg1, %3 : i32
    %c0_i32_1 = arith.constant 0 : i32
    %5 = arith.cmpi ne, %4, %c0_i32_1 : i32
    %c0_i32_2 = arith.constant 0 : i32
    %6 = arith.cmpi slt, %4, %c0_i32_2 : i32
    %c0_i32_3 = arith.constant 0 : i32
    %7 = arith.cmpi slt, %3, %c0_i32_3 : i32
    %8 = arith.xori %6, %7 : i1
    %9 = arith.andi %8, %5 : i1
    %10 = arith.addi %4, %3 : i32
    %11 = arith.select %9, %10, %4 : i32
    %c0_i32_4 = arith.constant 0 : i32
    %12 = arith.cmpi eq, %arg1, %c0_i32_4 : i32
    %13 = arith.extui %12 : i1 to i32
    %c0_i32_5 = arith.constant 0 : i32
    %14 = arith.cmpi ne, %13, %c0_i32_5 : i32
    scf.if %14 {
      %c24_i32 = arith.constant 24 : i32
      %177 = arith.muli %1, %c24_i32 : i32
      %c0_i32_119 = arith.constant 0 : i32
      %178 = arith.addi %177, %c0_i32_119 : i32
      %179 = arith.index_cast %178 : i32 to index
      %180 = memref.load %arg2[%179] : memref<24xi32, #tpu.memory_space<smem>>
      %c0_i32_120 = arith.constant 0 : i32
      %c0_i32_121 = arith.constant 0 : i32
      %c0_i32_122 = arith.constant 0 : i32
      %181 = tpu.memref_slice %arg4[%180, %c0_i32_122] : memref<32x256xf32, #tpu.memory_space<any>> -> memref<1x256xf32, #tpu.memory_space<any>>
      %c0_i32_123 = arith.constant 0 : i32
      %c0_i32_124 = arith.constant 0 : i32
      %182 = tpu.memref_slice %arg6[%c0_i32_120, %c0_i32_123, %c0_i32_124] : memref<2x24x256xf32, #tpu.memory_space<vmem>> -> memref<1x1x256xf32, #tpu.memory_space<vmem>>
      %183 = tpu.memref_squeeze %182 : memref<1x1x256xf32, #tpu.memory_space<vmem>> -> memref<1x256xf32, #tpu.memory_space<vmem>>
      %184 = tpu.memref_slice %arg7[%c0_i32_121] : memref<2x!tpu.dma_semaphore, #tpu.memory_space<semaphore_mem>> -> memref<1x!tpu.dma_semaphore, #tpu.memory_space<semaphore_mem>>
      %185 = tpu.memref_squeeze %184 : memref<1x!tpu.dma_semaphore, #tpu.memory_space<semaphore_mem>> -> memref<!tpu.dma_semaphore, #tpu.memory_space<semaphore_mem>>
      tpu.enqueue_dma source(%181 : memref<1x256xf32, #tpu.memory_space<any>>) target(%183 : memref<1x256xf32, #tpu.memory_space<vmem>>) target_semaphore(%185 : memref<!tpu.dma_semaphore, #tpu.memory_space<semaphore_mem>>)
      %c1_i32_125 = arith.constant 1 : i32
      %186 = arith.addi %177, %c1_i32_125 : i32
      %187 = arith.index_cast %186 : i32 to index
      %188 = memref.load %arg2[%187] : memref<24xi32, #tpu.memory_space<smem>>
      %c0_i32_126 = arith.constant 0 : i32
      %c0_i32_127 = arith.constant 0 : i32
      %c0_i32_128 = arith.constant 0 : i32
      %189 = tpu.memref_slice %arg4[%188, %c0_i32_128] : memref<32x256xf32, #tpu.memory_space<any>> -> memref<1x256xf32, #tpu.memory_space<any>>
      %c1_i32_129 = arith.constant 1 : i32
      %c0_i32_130 = arith.constant 0 : i32
      %190 = tpu.memref_slice %arg6[%c0_i32_126, %c1_i32_129, %c0_i32_130] : memref<2x24x256xf32, #tpu.memory_space<vmem>> -> memref<1x1x256xf32, #tpu.memory_space<vmem>>
      %191 = tpu.memref_squeeze %190 : memref<1x1x256xf32, #tpu.memory_space<vmem>> -> memref<1x256xf32, #tpu.memory_space<vmem>>
      %192 = tpu.memref_slice %arg7[%c0_i32_127] : memref<2x!tpu.dma_semaphore, #tpu.memory_space<semaphore_mem>> -> memref<1x!tpu.dma_semaphore, #tpu.memory_space<semaphore_mem>>
      %193 = tpu.memref_squeeze %192 : memref<1x!tpu.dma_semaphore, #tpu.memory_space<semaphore_mem>> -> memref<!tpu.dma_semaphore, #tpu.memory_space<semaphore_mem>>
      tpu.enqueue_dma source(%189 : memref<1x256xf32, #tpu.memory_space<any>>) target(%191 : memref<1x256xf32, #tpu.memory_space<vmem>>) target_semaphore(%193 : memref<!tpu.dma_semaphore, #tpu.memory_space<semaphore_mem>>)
      %c2_i32_131 = arith.constant 2 : i32
      %194 = arith.addi %177, %c2_i32_131 : i32
      %195 = arith.index_cast %194 : i32 to index
      %196 = memref.load %arg2[%195] : memref<24xi32, #tpu.memory_space<smem>>
      %c0_i32_132 = arith.constant 0 : i32
      %c0_i32_133 = arith.constant 0 : i32
      %c0_i32_134 = arith.constant 0 : i32
      %197 = tpu.memref_slice %arg4[%196, %c0_i32_134] : memref<32x256xf32, #tpu.memory_space<any>> -> memref<1x256xf32, #tpu.memory_space<any>>
      %c2_i32_135 = arith.constant 2 : i32
      %c0_i32_136 = arith.constant 0 : i32
      %198 = tpu.memref_slice %arg6[%c0_i32_132, %c2_i32_135, %c0_i32_136] : memref<2x24x256xf32, #tpu.memory_space<vmem>> -> memref<1x1x256xf32, #tpu.memory_space<vmem>>
      %199 = tpu.memref_squeeze %198 : memref<1x1x256xf32, #tpu.memory_space<vmem>> -> memref<1x256xf32, #tpu.memory_space<vmem>>
      %200 = tpu.memref_slice %arg7[%c0_i32_133] : memref<2x!tpu.dma_semaphore, #tpu.memory_space<semaphore_mem>> -> memref<1x!tpu.dma_semaphore, #tpu.memory_space<semaphore_mem>>
      %201 = tpu.memref_squeeze %200 : memref<1x!tpu.dma_semaphore, #tpu.memory_space<semaphore_mem>> -> memref<!tpu.dma_semaphore, #tpu.memory_space<semaphore_mem>>
      tpu.enqueue_dma source(%197 : memref<1x256xf32, #tpu.memory_space<any>>) target(%199 : memref<1x256xf32, #tpu.memory_space<vmem>>) target_semaphore(%201 : memref<!tpu.dma_semaphore, #tpu.memory_space<semaphore_mem>>)
      %c3_i32_137 = arith.constant 3 : i32
      %202 = arith.addi %177, %c3_i32_137 : i32
      %203 = arith.index_cast %202 : i32 to index
      %204 = memref.load %arg2[%203] : memref<24xi32, #tpu.memory_space<smem>>
      %c0_i32_138 = arith.constant 0 : i32
      %c0_i32_139 = arith.constant 0 : i32
      %c0_i32_140 = arith.constant 0 : i32
      %205 = tpu.memref_slice %arg4[%204, %c0_i32_140] : memref<32x256xf32, #tpu.memory_space<any>> -> memref<1x256xf32, #tpu.memory_space<any>>
      %c3_i32_141 = arith.constant 3 : i32
      %c0_i32_142 = arith.constant 0 : i32
      %206 = tpu.memref_slice %arg6[%c0_i32_138, %c3_i32_141, %c0_i32_142] : memref<2x24x256xf32, #tpu.memory_space<vmem>> -> memref<1x1x256xf32, #tpu.memory_space<vmem>>
      %207 = tpu.memref_squeeze %206 : memref<1x1x256xf32, #tpu.memory_space<vmem>> -> memref<1x256xf32, #tpu.memory_space<vmem>>
      %208 = tpu.memref_slice %arg7[%c0_i32_139] : memref<2x!tpu.dma_semaphore, #tpu.memory_space<semaphore_mem>> -> memref<1x!tpu.dma_semaphore, #tpu.memory_space<semaphore_mem>>
      %209 = tpu.memref_squeeze %208 : memref<1x!tpu.dma_semaphore, #tpu.memory_space<semaphore_mem>> -> memref<!tpu.dma_semaphore, #tpu.memory_space<semaphore_mem>>
      tpu.enqueue_dma source(%205 : memref<1x256xf32, #tpu.memory_space<any>>) target(%207 : memref<1x256xf32, #tpu.memory_space<vmem>>) target_semaphore(%209 : memref<!tpu.dma_semaphore, #tpu.memory_space<semaphore_mem>>)
      %c4_i32_143 = arith.constant 4 : i32
      %210 = arith.addi %177, %c4_i32_143 : i32
      %211 = arith.index_cast %210 : i32 to index
      %212 = memref.load %arg2[%211] : memref<24xi32, #tpu.memory_space<smem>>
      %c0_i32_144 = arith.constant 0 : i32
      %c0_i32_145 = arith.constant 0 : i32
      %c0_i32_146 = arith.constant 0 : i32
      %213 = tpu.memref_slice %arg4[%212, %c0_i32_146] : memref<32x256xf32, #tpu.memory_space<any>> -> memref<1x256xf32, #tpu.memory_space<any>>
      %c4_i32_147 = arith.constant 4 : i32
      %c0_i32_148 = arith.constant 0 : i32
      %214 = tpu.memref_slice %arg6[%c0_i32_144, %c4_i32_147, %c0_i32_148] : memref<2x24x256xf32, #tpu.memory_space<vmem>> -> memref<1x1x256xf32, #tpu.memory_space<vmem>>
      %215 = tpu.memref_squeeze %214 : memref<1x1x256xf32, #tpu.memory_space<vmem>> -> memref<1x256xf32, #tpu.memory_space<vmem>>
      %216 = tpu.memref_slice %arg7[%c0_i32_145] : memref<2x!tpu.dma_semaphore, #tpu.memory_space<semaphore_mem>> -> memref<1x!tpu.dma_semaphore, #tpu.memory_space<semaphore_mem>>
      %217 = tpu.memref_squeeze %216 : memref<1x!tpu.dma_semaphore, #tpu.memory_space<semaphore_mem>> -> memref<!tpu.dma_semaphore, #tpu.memory_space<semaphore_mem>>
      tpu.enqueue_dma source(%213 : memref<1x256xf32, #tpu.memory_space<any>>) target(%215 : memref<1x256xf32, #tpu.memory_space<vmem>>) target_semaphore(%217 : memref<!tpu.dma_semaphore, #tpu.memory_space<semaphore_mem>>)
      %c5_i32_149 = arith.constant 5 : i32
      %218 = arith.addi %177, %c5_i32_149 : i32
      %219 = arith.index_cast %218 : i32 to index
      %220 = memref.load %arg2[%219] : memref<24xi32, #tpu.memory_space<smem>>
      %c0_i32_150 = arith.constant 0 : i32
      %c0_i32_151 = arith.constant 0 : i32
      %c0_i32_152 = arith.constant 0 : i32
      %221 = tpu.memref_slice %arg4[%220, %c0_i32_152] : memref<32x256xf32, #tpu.memory_space<any>> -> memref<1x256xf32, #tpu.memory_space<any>>
      %c5_i32_153 = arith.constant 5 : i32
      %c0_i32_154 = arith.constant 0 : i32
      %222 = tpu.memref_slice %arg6[%c0_i32_150, %c5_i32_153, %c0_i32_154] : memref<2x24x256xf32, #tpu.memory_space<vmem>> -> memref<1x1x256xf32, #tpu.memory_space<vmem>>
      %223 = tpu.memref_squeeze %222 : memref<1x1x256xf32, #tpu.memory_space<vmem>> -> memref<1x256xf32, #tpu.memory_space<vmem>>
      %224 = tpu.memref_slice %arg7[%c0_i32_151] : memref<2x!tpu.dma_semaphore, #tpu.memory_space<semaphore_mem>> -> memref<1x!tpu.dma_semaphore, #tpu.memory_space<semaphore_mem>>
      %225 = tpu.memref_squeeze %224 : memref<1x!tpu.dma_semaphore, #tpu.memory_space<semaphore_mem>> -> memref<!tpu.dma_semaphore, #tpu.memory_space<semaphore_mem>>
      tpu.enqueue_dma source(%221 : memref<1x256xf32, #tpu.memory_space<any>>) target(%223 : memref<1x256xf32, #tpu.memory_space<vmem>>) target_semaphore(%225 : memref<!tpu.dma_semaphore, #tpu.memory_space<semaphore_mem>>)
      %c6_i32_155 = arith.constant 6 : i32
      %226 = arith.addi %177, %c6_i32_155 : i32
      %227 = arith.index_cast %226 : i32 to index
      %228 = memref.load %arg2[%227] : memref<24xi32, #tpu.memory_space<smem>>
      %c0_i32_156 = arith.constant 0 : i32
      %c0_i32_157 = arith.constant 0 : i32
      %c0_i32_158 = arith.constant 0 : i32
      %229 = tpu.memref_slice %arg4[%228, %c0_i32_158] : memref<32x256xf32, #tpu.memory_space<any>> -> memref<1x256xf32, #tpu.memory_space<any>>
      %c6_i32_159 = arith.constant 6 : i32
      %c0_i32_160 = arith.constant 0 : i32
      %230 = tpu.memref_slice %arg6[%c0_i32_156, %c6_i32_159, %c0_i32_160] : memref<2x24x256xf32, #tpu.memory_space<vmem>> -> memref<1x1x256xf32, #tpu.memory_space<vmem>>
      %231 = tpu.memref_squeeze %230 : memref<1x1x256xf32, #tpu.memory_space<vmem>> -> memref<1x256xf32, #tpu.memory_space<vmem>>
      %232 = tpu.memref_slice %arg7[%c0_i32_157] : memref<2x!tpu.dma_semaphore, #tpu.memory_space<semaphore_mem>> -> memref<1x!tpu.dma_semaphore, #tpu.memory_space<semaphore_mem>>
      %233 = tpu.memref_squeeze %232 : memref<1x!tpu.dma_semaphore, #tpu.memory_space<semaphore_mem>> -> memref<!tpu.dma_semaphore, #tpu.memory_space<semaphore_mem>>
      tpu.enqueue_dma source(%229 : memref<1x256xf32, #tpu.memory_space<any>>) target(%231 : memref<1x256xf32, #tpu.memory_space<vmem>>) target_semaphore(%233 : memref<!tpu.dma_semaphore, #tpu.memory_space<semaphore_mem>>)
      %c7_i32_161 = arith.constant 7 : i32
      %234 = arith.addi %177, %c7_i32_161 : i32
      %235 = arith.index_cast %234 : i32 to index
      %236 = memref.load %arg2[%235] : memref<24xi32, #tpu.memory_space<smem>>
      %c0_i32_162 = arith.constant 0 : i32
      %c0_i32_163 = arith.constant 0 : i32
      %c0_i32_164 = arith.constant 0 : i32
      %237 = tpu.memref_slice %arg4[%236, %c0_i32_164] : memref<32x256xf32, #tpu.memory_space<any>> -> memref<1x256xf32, #tpu.memory_space<any>>
      %c7_i32_165 = arith.constant 7 : i32
      %c0_i32_166 = arith.constant 0 : i32
      %238 = tpu.memref_slice %arg6[%c0_i32_162, %c7_i32_165, %c0_i32_166] : memref<2x24x256xf32, #tpu.memory_space<vmem>> -> memref<1x1x256xf32, #tpu.memory_space<vmem>>
      %239 = tpu.memref_squeeze %238 : memref<1x1x256xf32, #tpu.memory_space<vmem>> -> memref<1x256xf32, #tpu.memory_space<vmem>>
      %240 = tpu.memref_slice %arg7[%c0_i32_163] : memref<2x!tpu.dma_semaphore, #tpu.memory_space<semaphore_mem>> -> memref<1x!tpu.dma_semaphore, #tpu.memory_space<semaphore_mem>>
      %241 = tpu.memref_squeeze %240 : memref<1x!tpu.dma_semaphore, #tpu.memory_space<semaphore_mem>> -> memref<!tpu.dma_semaphore, #tpu.memory_space<semaphore_mem>>
      tpu.enqueue_dma source(%237 : memref<1x256xf32, #tpu.memory_space<any>>) target(%239 : memref<1x256xf32, #tpu.memory_space<vmem>>) target_semaphore(%241 : memref<!tpu.dma_semaphore, #tpu.memory_space<semaphore_mem>>)
      %c8_i32_167 = arith.constant 8 : i32
      %242 = arith.addi %177, %c8_i32_167 : i32
      %243 = arith.index_cast %242 : i32 to index
      %244 = memref.load %arg2[%243] : memref<24xi32, #tpu.memory_space<smem>>
      %c0_i32_168 = arith.constant 0 : i32
      %c0_i32_169 = arith.constant 0 : i32
      %c0_i32_170 = arith.constant 0 : i32
      %245 = tpu.memref_slice %arg4[%244, %c0_i32_170] : memref<32x256xf32, #tpu.memory_space<any>> -> memref<1x256xf32, #tpu.memory_space<any>>
      %c8_i32_171 = arith.constant 8 : i32
      %c0_i32_172 = arith.constant 0 : i32
      %246 = tpu.memref_slice %arg6[%c0_i32_168, %c8_i32_171, %c0_i32_172] : memref<2x24x256xf32, #tpu.memory_space<vmem>> -> memref<1x1x256xf32, #tpu.memory_space<vmem>>
      %247 = tpu.memref_squeeze %246 : memref<1x1x256xf32, #tpu.memory_space<vmem>> -> memref<1x256xf32, #tpu.memory_space<vmem>>
      %248 = tpu.memref_slice %arg7[%c0_i32_169] : memref<2x!tpu.dma_semaphore, #tpu.memory_space<semaphore_mem>> -> memref<1x!tpu.dma_semaphore, #tpu.memory_space<semaphore_mem>>
      %249 = tpu.memref_squeeze %248 : memref<1x!tpu.dma_semaphore, #tpu.memory_space<semaphore_mem>> -> memref<!tpu.dma_semaphore, #tpu.memory_space<semaphore_mem>>
      tpu.enqueue_dma source(%245 : memref<1x256xf32, #tpu.memory_space<any>>) target(%247 : memref<1x256xf32, #tpu.memory_space<vmem>>) target_semaphore(%249 : memref<!tpu.dma_semaphore, #tpu.memory_space<semaphore_mem>>)
      %c9_i32_173 = arith.constant 9 : i32
      %250 = arith.addi %177, %c9_i32_173 : i32
      %251 = arith.index_cast %250 : i32 to index
      %252 = memref.load %arg2[%251] : memref<24xi32, #tpu.memory_space<smem>>
      %c0_i32_174 = arith.constant 0 : i32
      %c0_i32_175 = arith.constant 0 : i32
      %c0_i32_176 = arith.constant 0 : i32
      %253 = tpu.memref_slice %arg4[%252, %c0_i32_176] : memref<32x256xf32, #tpu.memory_space<any>> -> memref<1x256xf32, #tpu.memory_space<any>>
      %c9_i32_177 = arith.constant 9 : i32
      %c0_i32_178 = arith.constant 0 : i32
      %254 = tpu.memref_slice %arg6[%c0_i32_174, %c9_i32_177, %c0_i32_178] : memref<2x24x256xf32, #tpu.memory_space<vmem>> -> memref<1x1x256xf32, #tpu.memory_space<vmem>>
      %255 = tpu.memref_squeeze %254 : memref<1x1x256xf32, #tpu.memory_space<vmem>> -> memref<1x256xf32, #tpu.memory_space<vmem>>
      %256 = tpu.memref_slice %arg7[%c0_i32_175] : memref<2x!tpu.dma_semaphore, #tpu.memory_space<semaphore_mem>> -> memref<1x!tpu.dma_semaphore, #tpu.memory_space<semaphore_mem>>
      %257 = tpu.memref_squeeze %256 : memref<1x!tpu.dma_semaphore, #tpu.memory_space<semaphore_mem>> -> memref<!tpu.dma_semaphore, #tpu.memory_space<semaphore_mem>>
      tpu.enqueue_dma source(%253 : memref<1x256xf32, #tpu.memory_space<any>>) target(%255 : memref<1x256xf32, #tpu.memory_space<vmem>>) target_semaphore(%257 : memref<!tpu.dma_semaphore, #tpu.memory_space<semaphore_mem>>)
      %c10_i32_179 = arith.constant 10 : i32
      %258 = arith.addi %177, %c10_i32_179 : i32
      %259 = arith.index_cast %258 : i32 to index
      %260 = memref.load %arg2[%259] : memref<24xi32, #tpu.memory_space<smem>>
      %c0_i32_180 = arith.constant 0 : i32
      %c0_i32_181 = arith.constant 0 : i32
      %c0_i32_182 = arith.constant 0 : i32
      %261 = tpu.memref_slice %arg4[%260, %c0_i32_182] : memref<32x256xf32, #tpu.memory_space<any>> -> memref<1x256xf32, #tpu.memory_space<any>>
      %c10_i32_183 = arith.constant 10 : i32
      %c0_i32_184 = arith.constant 0 : i32
      %262 = tpu.memref_slice %arg6[%c0_i32_180, %c10_i32_183, %c0_i32_184] : memref<2x24x256xf32, #tpu.memory_space<vmem>> -> memref<1x1x256xf32, #tpu.memory_space<vmem>>
      %263 = tpu.memref_squeeze %262 : memref<1x1x256xf32, #tpu.memory_space<vmem>> -> memref<1x256xf32, #tpu.memory_space<vmem>>
      %264 = tpu.memref_slice %arg7[%c0_i32_181] : memref<2x!tpu.dma_semaphore, #tpu.memory_space<semaphore_mem>> -> memref<1x!tpu.dma_semaphore, #tpu.memory_space<semaphore_mem>>
      %265 = tpu.memref_squeeze %264 : memref<1x!tpu.dma_semaphore, #tpu.memory_space<semaphore_mem>> -> memref<!tpu.dma_semaphore, #tpu.memory_space<semaphore_mem>>
      tpu.enqueue_dma source(%261 : memref<1x256xf32, #tpu.memory_space<any>>) target(%263 : memref<1x256xf32, #tpu.memory_space<vmem>>) target_semaphore(%265 : memref<!tpu.dma_semaphore, #tpu.memory_space<semaphore_mem>>)
      %c11_i32_185 = arith.constant 11 : i32
      %266 = arith.addi %177, %c11_i32_185 : i32
      %267 = arith.index_cast %266 : i32 to index
      %268 = memref.load %arg2[%267] : memref<24xi32, #tpu.memory_space<smem>>
      %c0_i32_186 = arith.constant 0 : i32
      %c0_i32_187 = arith.constant 0 : i32
      %c0_i32_188 = arith.constant 0 : i32
      %269 = tpu.memref_slice %arg4[%268, %c0_i32_188] : memref<32x256xf32, #tpu.memory_space<any>> -> memref<1x256xf32, #tpu.memory_space<any>>
      %c11_i32_189 = arith.constant 11 : i32
      %c0_i32_190 = arith.constant 0 : i32
      %270 = tpu.memref_slice %arg6[%c0_i32_186, %c11_i32_189, %c0_i32_190] : memref<2x24x256xf32, #tpu.memory_space<vmem>> -> memref<1x1x256xf32, #tpu.memory_space<vmem>>
      %271 = tpu.memref_squeeze %270 : memref<1x1x256xf32, #tpu.memory_space<vmem>> -> memref<1x256xf32, #tpu.memory_space<vmem>>
      %272 = tpu.memref_slice %arg7[%c0_i32_187] : memref<2x!tpu.dma_semaphore, #tpu.memory_space<semaphore_mem>> -> memref<1x!tpu.dma_semaphore, #tpu.memory_space<semaphore_mem>>
      %273 = tpu.memref_squeeze %272 : memref<1x!tpu.dma_semaphore, #tpu.memory_space<semaphore_mem>> -> memref<!tpu.dma_semaphore, #tpu.memory_space<semaphore_mem>>
      tpu.enqueue_dma source(%269 : memref<1x256xf32, #tpu.memory_space<any>>) target(%271 : memref<1x256xf32, #tpu.memory_space<vmem>>) target_semaphore(%273 : memref<!tpu.dma_semaphore, #tpu.memory_space<semaphore_mem>>)
      %c12_i32_191 = arith.constant 12 : i32
      %274 = arith.addi %177, %c12_i32_191 : i32
      %275 = arith.index_cast %274 : i32 to index
      %276 = memref.load %arg2[%275] : memref<24xi32, #tpu.memory_space<smem>>
      %c0_i32_192 = arith.constant 0 : i32
      %c0_i32_193 = arith.constant 0 : i32
      %c0_i32_194 = arith.constant 0 : i32
      %277 = tpu.memref_slice %arg4[%276, %c0_i32_194] : memref<32x256xf32, #tpu.memory_space<any>> -> memref<1x256xf32, #tpu.memory_space<any>>
      %c12_i32_195 = arith.constant 12 : i32
      %c0_i32_196 = arith.constant 0 : i32
      %278 = tpu.memref_slice %arg6[%c0_i32_192, %c12_i32_195, %c0_i32_196] : memref<2x24x256xf32, #tpu.memory_space<vmem>> -> memref<1x1x256xf32, #tpu.memory_space<vmem>>
      %279 = tpu.memref_squeeze %278 : memref<1x1x256xf32, #tpu.memory_space<vmem>> -> memref<1x256xf32, #tpu.memory_space<vmem>>
      %280 = tpu.memref_slice %arg7[%c0_i32_193] : memref<2x!tpu.dma_semaphore, #tpu.memory_space<semaphore_mem>> -> memref<1x!tpu.dma_semaphore, #tpu.memory_space<semaphore_mem>>
      %281 = tpu.memref_squeeze %280 : memref<1x!tpu.dma_semaphore, #tpu.memory_space<semaphore_mem>> -> memref<!tpu.dma_semaphore, #tpu.memory_space<semaphore_mem>>
      tpu.enqueue_dma source(%277 : memref<1x256xf32, #tpu.memory_space<any>>) target(%279 : memref<1x256xf32, #tpu.memory_space<vmem>>) target_semaphore(%281 : memref<!tpu.dma_semaphore, #tpu.memory_space<semaphore_mem>>)
      %c13_i32_197 = arith.constant 13 : i32
      %282 = arith.addi %177, %c13_i32_197 : i32
      %283 = arith.index_cast %282 : i32 to index
      %284 = memref.load %arg2[%283] : memref<24xi32, #tpu.memory_space<smem>>
      %c0_i32_198 = arith.constant 0 : i32
      %c0_i32_199 = arith.constant 0 : i32
      %c0_i32_200 = arith.constant 0 : i32
      %285 = tpu.memref_slice %arg4[%284, %c0_i32_200] : memref<32x256xf32, #tpu.memory_space<any>> -> memref<1x256xf32, #tpu.memory_space<any>>
      %c13_i32_201 = arith.constant 13 : i32
      %c0_i32_202 = arith.constant 0 : i32
      %286 = tpu.memref_slice %arg6[%c0_i32_198, %c13_i32_201, %c0_i32_202] : memref<2x24x256xf32, #tpu.memory_space<vmem>> -> memref<1x1x256xf32, #tpu.memory_space<vmem>>
      %287 = tpu.memref_squeeze %286 : memref<1x1x256xf32, #tpu.memory_space<vmem>> -> memref<1x256xf32, #tpu.memory_space<vmem>>
      %288 = tpu.memref_slice %arg7[%c0_i32_199] : memref<2x!tpu.dma_semaphore, #tpu.memory_space<semaphore_mem>> -> memref<1x!tpu.dma_semaphore, #tpu.memory_space<semaphore_mem>>
      %289 = tpu.memref_squeeze %288 : memref<1x!tpu.dma_semaphore, #tpu.memory_space<semaphore_mem>> -> memref<!tpu.dma_semaphore, #tpu.memory_space<semaphore_mem>>
      tpu.enqueue_dma source(%285 : memref<1x256xf32, #tpu.memory_space<any>>) target(%287 : memref<1x256xf32, #tpu.memory_space<vmem>>) target_semaphore(%289 : memref<!tpu.dma_semaphore, #tpu.memory_space<semaphore_mem>>)
      %c14_i32_203 = arith.constant 14 : i32
      %290 = arith.addi %177, %c14_i32_203 : i32
      %291 = arith.index_cast %290 : i32 to index
      %292 = memref.load %arg2[%291] : memref<24xi32, #tpu.memory_space<smem>>
      %c0_i32_204 = arith.constant 0 : i32
      %c0_i32_205 = arith.constant 0 : i32
      %c0_i32_206 = arith.constant 0 : i32
      %293 = tpu.memref_slice %arg4[%292, %c0_i32_206] : memref<32x256xf32, #tpu.memory_space<any>> -> memref<1x256xf32, #tpu.memory_space<any>>
      %c14_i32_207 = arith.constant 14 : i32
      %c0_i32_208 = arith.constant 0 : i32
      %294 = tpu.memref_slice %arg6[%c0_i32_204, %c14_i32_207, %c0_i32_208] : memref<2x24x256xf32, #tpu.memory_space<vmem>> -> memref<1x1x256xf32, #tpu.memory_space<vmem>>
      %295 = tpu.memref_squeeze %294 : memref<1x1x256xf32, #tpu.memory_space<vmem>> -> memref<1x256xf32, #tpu.memory_space<vmem>>
      %296 = tpu.memref_slice %arg7[%c0_i32_205] : memref<2x!tpu.dma_semaphore, #tpu.memory_space<semaphore_mem>> -> memref<1x!tpu.dma_semaphore, #tpu.memory_space<semaphore_mem>>
      %297 = tpu.memref_squeeze %296 : memref<1x!tpu.dma_semaphore, #tpu.memory_space<semaphore_mem>> -> memref<!tpu.dma_semaphore, #tpu.memory_space<semaphore_mem>>
      tpu.enqueue_dma source(%293 : memref<1x256xf32, #tpu.memory_space<any>>) target(%295 : memref<1x256xf32, #tpu.memory_space<vmem>>) target_semaphore(%297 : memref<!tpu.dma_semaphore, #tpu.memory_space<semaphore_mem>>)
      %c15_i32_209 = arith.constant 15 : i32
      %298 = arith.addi %177, %c15_i32_209 : i32
      %299 = arith.index_cast %298 : i32 to index
      %300 = memref.load %arg2[%299] : memref<24xi32, #tpu.memory_space<smem>>
      %c0_i32_210 = arith.constant 0 : i32
      %c0_i32_211 = arith.constant 0 : i32
      %c0_i32_212 = arith.constant 0 : i32
      %301 = tpu.memref_slice %arg4[%300, %c0_i32_212] : memref<32x256xf32, #tpu.memory_space<any>> -> memref<1x256xf32, #tpu.memory_space<any>>
      %c15_i32_213 = arith.constant 15 : i32
      %c0_i32_214 = arith.constant 0 : i32
      %302 = tpu.memref_slice %arg6[%c0_i32_210, %c15_i32_213, %c0_i32_214] : memref<2x24x256xf32, #tpu.memory_space<vmem>> -> memref<1x1x256xf32, #tpu.memory_space<vmem>>
      %303 = tpu.memref_squeeze %302 : memref<1x1x256xf32, #tpu.memory_space<vmem>> -> memref<1x256xf32, #tpu.memory_space<vmem>>
      %304 = tpu.memref_slice %arg7[%c0_i32_211] : memref<2x!tpu.dma_semaphore, #tpu.memory_space<semaphore_mem>> -> memref<1x!tpu.dma_semaphore, #tpu.memory_space<semaphore_mem>>
      %305 = tpu.memref_squeeze %304 : memref<1x!tpu.dma_semaphore, #tpu.memory_space<semaphore_mem>> -> memref<!tpu.dma_semaphore, #tpu.memory_space<semaphore_mem>>
      tpu.enqueue_dma source(%301 : memref<1x256xf32, #tpu.memory_space<any>>) target(%303 : memref<1x256xf32, #tpu.memory_space<vmem>>) target_semaphore(%305 : memref<!tpu.dma_semaphore, #tpu.memory_space<semaphore_mem>>)
      %c16_i32_215 = arith.constant 16 : i32
      %306 = arith.addi %177, %c16_i32_215 : i32
      %307 = arith.index_cast %306 : i32 to index
      %308 = memref.load %arg2[%307] : memref<24xi32, #tpu.memory_space<smem>>
      %c0_i32_216 = arith.constant 0 : i32
      %c0_i32_217 = arith.constant 0 : i32
      %c0_i32_218 = arith.constant 0 : i32
      %309 = tpu.memref_slice %arg4[%308, %c0_i32_218] : memref<32x256xf32, #tpu.memory_space<any>> -> memref<1x256xf32, #tpu.memory_space<any>>
      %c16_i32_219 = arith.constant 16 : i32
      %c0_i32_220 = arith.constant 0 : i32
      %310 = tpu.memref_slice %arg6[%c0_i32_216, %c16_i32_219, %c0_i32_220] : memref<2x24x256xf32, #tpu.memory_space<vmem>> -> memref<1x1x256xf32, #tpu.memory_space<vmem>>
      %311 = tpu.memref_squeeze %310 : memref<1x1x256xf32, #tpu.memory_space<vmem>> -> memref<1x256xf32, #tpu.memory_space<vmem>>
      %312 = tpu.memref_slice %arg7[%c0_i32_217] : memref<2x!tpu.dma_semaphore, #tpu.memory_space<semaphore_mem>> -> memref<1x!tpu.dma_semaphore, #tpu.memory_space<semaphore_mem>>
      %313 = tpu.memref_squeeze %312 : memref<1x!tpu.dma_semaphore, #tpu.memory_space<semaphore_mem>> -> memref<!tpu.dma_semaphore, #tpu.memory_space<semaphore_mem>>
      tpu.enqueue_dma source(%309 : memref<1x256xf32, #tpu.memory_space<any>>) target(%311 : memref<1x256xf32, #tpu.memory_space<vmem>>) target_semaphore(%313 : memref<!tpu.dma_semaphore, #tpu.memory_space<semaphore_mem>>)
      %c17_i32_221 = arith.constant 17 : i32
      %314 = arith.addi %177, %c17_i32_221 : i32
      %315 = arith.index_cast %314 : i32 to index
      %316 = memref.load %arg2[%315] : memref<24xi32, #tpu.memory_space<smem>>
      %c0_i32_222 = arith.constant 0 : i32
      %c0_i32_223 = arith.constant 0 : i32
      %c0_i32_224 = arith.constant 0 : i32
      %317 = tpu.memref_slice %arg4[%316, %c0_i32_224] : memref<32x256xf32, #tpu.memory_space<any>> -> memref<1x256xf32, #tpu.memory_space<any>>
      %c17_i32_225 = arith.constant 17 : i32
      %c0_i32_226 = arith.constant 0 : i32
      %318 = tpu.memref_slice %arg6[%c0_i32_222, %c17_i32_225, %c0_i32_226] : memref<2x24x256xf32, #tpu.memory_space<vmem>> -> memref<1x1x256xf32, #tpu.memory_space<vmem>>
      %319 = tpu.memref_squeeze %318 : memref<1x1x256xf32, #tpu.memory_space<vmem>> -> memref<1x256xf32, #tpu.memory_space<vmem>>
      %320 = tpu.memref_slice %arg7[%c0_i32_223] : memref<2x!tpu.dma_semaphore, #tpu.memory_space<semaphore_mem>> -> memref<1x!tpu.dma_semaphore, #tpu.memory_space<semaphore_mem>>
      %321 = tpu.memref_squeeze %320 : memref<1x!tpu.dma_semaphore, #tpu.memory_space<semaphore_mem>> -> memref<!tpu.dma_semaphore, #tpu.memory_space<semaphore_mem>>
      tpu.enqueue_dma source(%317 : memref<1x256xf32, #tpu.memory_space<any>>) target(%319 : memref<1x256xf32, #tpu.memory_space<vmem>>) target_semaphore(%321 : memref<!tpu.dma_semaphore, #tpu.memory_space<semaphore_mem>>)
      %c18_i32_227 = arith.constant 18 : i32
      %322 = arith.addi %177, %c18_i32_227 : i32
      %323 = arith.index_cast %322 : i32 to index
      %324 = memref.load %arg2[%323] : memref<24xi32, #tpu.memory_space<smem>>
      %c0_i32_228 = arith.constant 0 : i32
      %c0_i32_229 = arith.constant 0 : i32
      %c0_i32_230 = arith.constant 0 : i32
      %325 = tpu.memref_slice %arg4[%324, %c0_i32_230] : memref<32x256xf32, #tpu.memory_space<any>> -> memref<1x256xf32, #tpu.memory_space<any>>
      %c18_i32_231 = arith.constant 18 : i32
      %c0_i32_232 = arith.constant 0 : i32
      %326 = tpu.memref_slice %arg6[%c0_i32_228, %c18_i32_231, %c0_i32_232] : memref<2x24x256xf32, #tpu.memory_space<vmem>> -> memref<1x1x256xf32, #tpu.memory_space<vmem>>
      %327 = tpu.memref_squeeze %326 : memref<1x1x256xf32, #tpu.memory_space<vmem>> -> memref<1x256xf32, #tpu.memory_space<vmem>>
      %328 = tpu.memref_slice %arg7[%c0_i32_229] : memref<2x!tpu.dma_semaphore, #tpu.memory_space<semaphore_mem>> -> memref<1x!tpu.dma_semaphore, #tpu.memory_space<semaphore_mem>>
      %329 = tpu.memref_squeeze %328 : memref<1x!tpu.dma_semaphore, #tpu.memory_space<semaphore_mem>> -> memref<!tpu.dma_semaphore, #tpu.memory_space<semaphore_mem>>
      tpu.enqueue_dma source(%325 : memref<1x256xf32, #tpu.memory_space<any>>) target(%327 : memref<1x256xf32, #tpu.memory_space<vmem>>) target_semaphore(%329 : memref<!tpu.dma_semaphore, #tpu.memory_space<semaphore_mem>>)
      %c19_i32_233 = arith.constant 19 : i32
      %330 = arith.addi %177, %c19_i32_233 : i32
      %331 = arith.index_cast %330 : i32 to index
      %332 = memref.load %arg2[%331] : memref<24xi32, #tpu.memory_space<smem>>
      %c0_i32_234 = arith.constant 0 : i32
      %c0_i32_235 = arith.constant 0 : i32
      %c0_i32_236 = arith.constant 0 : i32
      %333 = tpu.memref_slice %arg4[%332, %c0_i32_236] : memref<32x256xf32, #tpu.memory_space<any>> -> memref<1x256xf32, #tpu.memory_space<any>>
      %c19_i32_237 = arith.constant 19 : i32
      %c0_i32_238 = arith.constant 0 : i32
      %334 = tpu.memref_slice %arg6[%c0_i32_234, %c19_i32_237, %c0_i32_238] : memref<2x24x256xf32, #tpu.memory_space<vmem>> -> memref<1x1x256xf32, #tpu.memory_space<vmem>>
      %335 = tpu.memref_squeeze %334 : memref<1x1x256xf32, #tpu.memory_space<vmem>> -> memref<1x256xf32, #tpu.memory_space<vmem>>
      %336 = tpu.memref_slice %arg7[%c0_i32_235] : memref<2x!tpu.dma_semaphore, #tpu.memory_space<semaphore_mem>> -> memref<1x!tpu.dma_semaphore, #tpu.memory_space<semaphore_mem>>
      %337 = tpu.memref_squeeze %336 : memref<1x!tpu.dma_semaphore, #tpu.memory_space<semaphore_mem>> -> memref<!tpu.dma_semaphore, #tpu.memory_space<semaphore_mem>>
      tpu.enqueue_dma source(%333 : memref<1x256xf32, #tpu.memory_space<any>>) target(%335 : memref<1x256xf32, #tpu.memory_space<vmem>>) target_semaphore(%337 : memref<!tpu.dma_semaphore, #tpu.memory_space<semaphore_mem>>)
      %c20_i32_239 = arith.constant 20 : i32
      %338 = arith.addi %177, %c20_i32_239 : i32
      %339 = arith.index_cast %338 : i32 to index
      %340 = memref.load %arg2[%339] : memref<24xi32, #tpu.memory_space<smem>>
      %c0_i32_240 = arith.constant 0 : i32
      %c0_i32_241 = arith.constant 0 : i32
      %c0_i32_242 = arith.constant 0 : i32
      %341 = tpu.memref_slice %arg4[%340, %c0_i32_242] : memref<32x256xf32, #tpu.memory_space<any>> -> memref<1x256xf32, #tpu.memory_space<any>>
      %c20_i32_243 = arith.constant 20 : i32
      %c0_i32_244 = arith.constant 0 : i32
      %342 = tpu.memref_slice %arg6[%c0_i32_240, %c20_i32_243, %c0_i32_244] : memref<2x24x256xf32, #tpu.memory_space<vmem>> -> memref<1x1x256xf32, #tpu.memory_space<vmem>>
      %343 = tpu.memref_squeeze %342 : memref<1x1x256xf32, #tpu.memory_space<vmem>> -> memref<1x256xf32, #tpu.memory_space<vmem>>
      %344 = tpu.memref_slice %arg7[%c0_i32_241] : memref<2x!tpu.dma_semaphore, #tpu.memory_space<semaphore_mem>> -> memref<1x!tpu.dma_semaphore, #tpu.memory_space<semaphore_mem>>
      %345 = tpu.memref_squeeze %344 : memref<1x!tpu.dma_semaphore, #tpu.memory_space<semaphore_mem>> -> memref<!tpu.dma_semaphore, #tpu.memory_space<semaphore_mem>>
      tpu.enqueue_dma source(%341 : memref<1x256xf32, #tpu.memory_space<any>>) target(%343 : memref<1x256xf32, #tpu.memory_space<vmem>>) target_semaphore(%345 : memref<!tpu.dma_semaphore, #tpu.memory_space<semaphore_mem>>)
      %c21_i32_245 = arith.constant 21 : i32
      %346 = arith.addi %177, %c21_i32_245 : i32
      %347 = arith.index_cast %346 : i32 to index
      %348 = memref.load %arg2[%347] : memref<24xi32, #tpu.memory_space<smem>>
      %c0_i32_246 = arith.constant 0 : i32
      %c0_i32_247 = arith.constant 0 : i32
      %c0_i32_248 = arith.constant 0 : i32
      %349 = tpu.memref_slice %arg4[%348, %c0_i32_248] : memref<32x256xf32, #tpu.memory_space<any>> -> memref<1x256xf32, #tpu.memory_space<any>>
      %c21_i32_249 = arith.constant 21 : i32
      %c0_i32_250 = arith.constant 0 : i32
      %350 = tpu.memref_slice %arg6[%c0_i32_246, %c21_i32_249, %c0_i32_250] : memref<2x24x256xf32, #tpu.memory_space<vmem>> -> memref<1x1x256xf32, #tpu.memory_space<vmem>>
      %351 = tpu.memref_squeeze %350 : memref<1x1x256xf32, #tpu.memory_space<vmem>> -> memref<1x256xf32, #tpu.memory_space<vmem>>
      %352 = tpu.memref_slice %arg7[%c0_i32_247] : memref<2x!tpu.dma_semaphore, #tpu.memory_space<semaphore_mem>> -> memref<1x!tpu.dma_semaphore, #tpu.memory_space<semaphore_mem>>
      %353 = tpu.memref_squeeze %352 : memref<1x!tpu.dma_semaphore, #tpu.memory_space<semaphore_mem>> -> memref<!tpu.dma_semaphore, #tpu.memory_space<semaphore_mem>>
      tpu.enqueue_dma source(%349 : memref<1x256xf32, #tpu.memory_space<any>>) target(%351 : memref<1x256xf32, #tpu.memory_space<vmem>>) target_semaphore(%353 : memref<!tpu.dma_semaphore, #tpu.memory_space<semaphore_mem>>)
      %c22_i32_251 = arith.constant 22 : i32
      %354 = arith.addi %177, %c22_i32_251 : i32
      %355 = arith.index_cast %354 : i32 to index
      %356 = memref.load %arg2[%355] : memref<24xi32, #tpu.memory_space<smem>>
      %c0_i32_252 = arith.constant 0 : i32
      %c0_i32_253 = arith.constant 0 : i32
      %c0_i32_254 = arith.constant 0 : i32
      %357 = tpu.memref_slice %arg4[%356, %c0_i32_254] : memref<32x256xf32, #tpu.memory_space<any>> -> memref<1x256xf32, #tpu.memory_space<any>>
      %c22_i32_255 = arith.constant 22 : i32
      %c0_i32_256 = arith.constant 0 : i32
      %358 = tpu.memref_slice %arg6[%c0_i32_252, %c22_i32_255, %c0_i32_256] : memref<2x24x256xf32, #tpu.memory_space<vmem>> -> memref<1x1x256xf32, #tpu.memory_space<vmem>>
      %359 = tpu.memref_squeeze %358 : memref<1x1x256xf32, #tpu.memory_space<vmem>> -> memref<1x256xf32, #tpu.memory_space<vmem>>
      %360 = tpu.memref_slice %arg7[%c0_i32_253] : memref<2x!tpu.dma_semaphore, #tpu.memory_space<semaphore_mem>> -> memref<1x!tpu.dma_semaphore, #tpu.memory_space<semaphore_mem>>
      %361 = tpu.memref_squeeze %360 : memref<1x!tpu.dma_semaphore, #tpu.memory_space<semaphore_mem>> -> memref<!tpu.dma_semaphore, #tpu.memory_space<semaphore_mem>>
      tpu.enqueue_dma source(%357 : memref<1x256xf32, #tpu.memory_space<any>>) target(%359 : memref<1x256xf32, #tpu.memory_space<vmem>>) target_semaphore(%361 : memref<!tpu.dma_semaphore, #tpu.memory_space<semaphore_mem>>)
      %c23_i32_257 = arith.constant 23 : i32
      %362 = arith.addi %177, %c23_i32_257 : i32
      %363 = arith.index_cast %362 : i32 to index
      %364 = memref.load %arg2[%363] : memref<24xi32, #tpu.memory_space<smem>>
      %c0_i32_258 = arith.constant 0 : i32
      %c0_i32_259 = arith.constant 0 : i32
      %c0_i32_260 = arith.constant 0 : i32
      %365 = tpu.memref_slice %arg4[%364, %c0_i32_260] : memref<32x256xf32, #tpu.memory_space<any>> -> memref<1x256xf32, #tpu.memory_space<any>>
      %c23_i32_261 = arith.constant 23 : i32
      %c0_i32_262 = arith.constant 0 : i32
      %366 = tpu.memref_slice %arg6[%c0_i32_258, %c23_i32_261, %c0_i32_262] : memref<2x24x256xf32, #tpu.memory_space<vmem>> -> memref<1x1x256xf32, #tpu.memory_space<vmem>>
      %367 = tpu.memref_squeeze %366 : memref<1x1x256xf32, #tpu.memory_space<vmem>> -> memref<1x256xf32, #tpu.memory_space<vmem>>
      %368 = tpu.memref_slice %arg7[%c0_i32_259] : memref<2x!tpu.dma_semaphore, #tpu.memory_space<semaphore_mem>> -> memref<1x!tpu.dma_semaphore, #tpu.memory_space<semaphore_mem>>
      %369 = tpu.memref_squeeze %368 : memref<1x!tpu.dma_semaphore, #tpu.memory_space<semaphore_mem>> -> memref<!tpu.dma_semaphore, #tpu.memory_space<semaphore_mem>>
      tpu.enqueue_dma source(%365 : memref<1x256xf32, #tpu.memory_space<any>>) target(%367 : memref<1x256xf32, #tpu.memory_space<vmem>>) target_semaphore(%369 : memref<!tpu.dma_semaphore, #tpu.memory_space<semaphore_mem>>)
    } else {
    }
    %c0_i32_6 = arith.constant 0 : i32
    %c0_i32_7 = arith.constant 0 : i32
    %15 = tpu.memref_slice %arg4[%c0_i32_6, %c0_i32_7] : memref<32x256xf32, #tpu.memory_space<any>> -> memref<1x256xf32, #tpu.memory_space<any>>
    %c0_i32_8 = arith.constant 0 : i32
    %c0_i32_9 = arith.constant 0 : i32
    %16 = tpu.memref_slice %arg6[%11, %c0_i32_8, %c0_i32_9] : memref<2x24x256xf32, #tpu.memory_space<vmem>> -> memref<1x1x256xf32, #tpu.memory_space<vmem>>
    %17 = tpu.memref_squeeze %16 : memref<1x1x256xf32, #tpu.memory_space<vmem>> -> memref<1x256xf32, #tpu.memory_space<vmem>>
    %18 = tpu.memref_slice %arg7[%11] : memref<2x!tpu.dma_semaphore, #tpu.memory_space<semaphore_mem>> -> memref<1x!tpu.dma_semaphore, #tpu.memory_space<semaphore_mem>>
    %19 = tpu.memref_squeeze %18 : memref<1x!tpu.dma_semaphore, #tpu.memory_space<semaphore_mem>> -> memref<!tpu.dma_semaphore, #tpu.memory_space<semaphore_mem>>
    tpu.wait_dma2 semaphore(%19 : memref<!tpu.dma_semaphore, #tpu.memory_space<semaphore_mem>>) src(%15 : memref<1x256xf32, #tpu.memory_space<any>>) dst(%17 : memref<1x256xf32, #tpu.memory_space<vmem>>)
    %c0_i32_10 = arith.constant 0 : i32
    %c0_i32_11 = arith.constant 0 : i32
    %20 = tpu.memref_slice %arg4[%c0_i32_10, %c0_i32_11] : memref<32x256xf32, #tpu.memory_space<any>> -> memref<1x256xf32, #tpu.memory_space<any>>
    %c1_i32_12 = arith.constant 1 : i32
    %c0_i32_13 = arith.constant 0 : i32
    %21 = tpu.memref_slice %arg6[%11, %c1_i32_12, %c0_i32_13] : memref<2x24x256xf32, #tpu.memory_space<vmem>> -> memref<1x1x256xf32, #tpu.memory_space<vmem>>
    %22 = tpu.memref_squeeze %21 : memref<1x1x256xf32, #tpu.memory_space<vmem>> -> memref<1x256xf32, #tpu.memory_space<vmem>>
    %23 = tpu.memref_slice %arg7[%11] : memref<2x!tpu.dma_semaphore, #tpu.memory_space<semaphore_mem>> -> memref<1x!tpu.dma_semaphore, #tpu.memory_space<semaphore_mem>>
    %24 = tpu.memref_squeeze %23 : memref<1x!tpu.dma_semaphore, #tpu.memory_space<semaphore_mem>> -> memref<!tpu.dma_semaphore, #tpu.memory_space<semaphore_mem>>
    tpu.wait_dma2 semaphore(%24 : memref<!tpu.dma_semaphore, #tpu.memory_space<semaphore_mem>>) src(%20 : memref<1x256xf32, #tpu.memory_space<any>>) dst(%22 : memref<1x256xf32, #tpu.memory_space<vmem>>)
    %c0_i32_14 = arith.constant 0 : i32
    %c0_i32_15 = arith.constant 0 : i32
    %25 = tpu.memref_slice %arg4[%c0_i32_14, %c0_i32_15] : memref<32x256xf32, #tpu.memory_space<any>> -> memref<1x256xf32, #tpu.memory_space<any>>
    %c2_i32_16 = arith.constant 2 : i32
    %c0_i32_17 = arith.constant 0 : i32
    %26 = tpu.memref_slice %arg6[%11, %c2_i32_16, %c0_i32_17] : memref<2x24x256xf32, #tpu.memory_space<vmem>> -> memref<1x1x256xf32, #tpu.memory_space<vmem>>
    %27 = tpu.memref_squeeze %26 : memref<1x1x256xf32, #tpu.memory_space<vmem>> -> memref<1x256xf32, #tpu.memory_space<vmem>>
    %28 = tpu.memref_slice %arg7[%11] : memref<2x!tpu.dma_semaphore, #tpu.memory_space<semaphore_mem>> -> memref<1x!tpu.dma_semaphore, #tpu.memory_space<semaphore_mem>>
    %29 = tpu.memref_squeeze %28 : memref<1x!tpu.dma_semaphore, #tpu.memory_space<semaphore_mem>> -> memref<!tpu.dma_semaphore, #tpu.memory_space<semaphore_mem>>
    tpu.wait_dma2 semaphore(%29 : memref<!tpu.dma_semaphore, #tpu.memory_space<semaphore_mem>>) src(%25 : memref<1x256xf32, #tpu.memory_space<any>>) dst(%27 : memref<1x256xf32, #tpu.memory_space<vmem>>)
    %c0_i32_18 = arith.constant 0 : i32
    %c0_i32_19 = arith.constant 0 : i32
    %30 = tpu.memref_slice %arg4[%c0_i32_18, %c0_i32_19] : memref<32x256xf32, #tpu.memory_space<any>> -> memref<1x256xf32, #tpu.memory_space<any>>
    %c3_i32 = arith.constant 3 : i32
    %c0_i32_20 = arith.constant 0 : i32
    %31 = tpu.memref_slice %arg6[%11, %c3_i32, %c0_i32_20] : memref<2x24x256xf32, #tpu.memory_space<vmem>> -> memref<1x1x256xf32, #tpu.memory_space<vmem>>
    %32 = tpu.memref_squeeze %31 : memref<1x1x256xf32, #tpu.memory_space<vmem>> -> memref<1x256xf32, #tpu.memory_space<vmem>>
    %33 = tpu.memref_slice %arg7[%11] : memref<2x!tpu.dma_semaphore, #tpu.memory_space<semaphore_mem>> -> memref<1x!tpu.dma_semaphore, #tpu.memory_space<semaphore_mem>>
    %34 = tpu.memref_squeeze %33 : memref<1x!tpu.dma_semaphore, #tpu.memory_space<semaphore_mem>> -> memref<!tpu.dma_semaphore, #tpu.memory_space<semaphore_mem>>
    tpu.wait_dma2 semaphore(%34 : memref<!tpu.dma_semaphore, #tpu.memory_space<semaphore_mem>>) src(%30 : memref<1x256xf32, #tpu.memory_space<any>>) dst(%32 : memref<1x256xf32, #tpu.memory_space<vmem>>)
    %c0_i32_21 = arith.constant 0 : i32
    %c0_i32_22 = arith.constant 0 : i32
    %35 = tpu.memref_slice %arg4[%c0_i32_21, %c0_i32_22] : memref<32x256xf32, #tpu.memory_space<any>> -> memref<1x256xf32, #tpu.memory_space<any>>
    %c4_i32 = arith.constant 4 : i32
    %c0_i32_23 = arith.constant 0 : i32
    %36 = tpu.memref_slice %arg6[%11, %c4_i32, %c0_i32_23] : memref<2x24x256xf32, #tpu.memory_space<vmem>> -> memref<1x1x256xf32, #tpu.memory_space<vmem>>
    %37 = tpu.memref_squeeze %36 : memref<1x1x256xf32, #tpu.memory_space<vmem>> -> memref<1x256xf32, #tpu.memory_space<vmem>>
    %38 = tpu.memref_slice %arg7[%11] : memref<2x!tpu.dma_semaphore, #tpu.memory_space<semaphore_mem>> -> memref<1x!tpu.dma_semaphore, #tpu.memory_space<semaphore_mem>>
    %39 = tpu.memref_squeeze %38 : memref<1x!tpu.dma_semaphore, #tpu.memory_space<semaphore_mem>> -> memref<!tpu.dma_semaphore, #tpu.memory_space<semaphore_mem>>
    tpu.wait_dma2 semaphore(%39 : memref<!tpu.dma_semaphore, #tpu.memory_space<semaphore_mem>>) src(%35 : memref<1x256xf32, #tpu.memory_space<any>>) dst(%37 : memref<1x256xf32, #tpu.memory_space<vmem>>)
    %c0_i32_24 = arith.constant 0 : i32
    %c0_i32_25 = arith.constant 0 : i32
    %40 = tpu.memref_slice %arg4[%c0_i32_24, %c0_i32_25] : memref<32x256xf32, #tpu.memory_space<any>> -> memref<1x256xf32, #tpu.memory_space<any>>
    %c5_i32 = arith.constant 5 : i32
    %c0_i32_26 = arith.constant 0 : i32
    %41 = tpu.memref_slice %arg6[%11, %c5_i32, %c0_i32_26] : memref<2x24x256xf32, #tpu.memory_space<vmem>> -> memref<1x1x256xf32, #tpu.memory_space<vmem>>
    %42 = tpu.memref_squeeze %41 : memref<1x1x256xf32, #tpu.memory_space<vmem>> -> memref<1x256xf32, #tpu.memory_space<vmem>>
    %43 = tpu.memref_slice %arg7[%11] : memref<2x!tpu.dma_semaphore, #tpu.memory_space<semaphore_mem>> -> memref<1x!tpu.dma_semaphore, #tpu.memory_space<semaphore_mem>>
    %44 = tpu.memref_squeeze %43 : memref<1x!tpu.dma_semaphore, #tpu.memory_space<semaphore_mem>> -> memref<!tpu.dma_semaphore, #tpu.memory_space<semaphore_mem>>
    tpu.wait_dma2 semaphore(%44 : memref<!tpu.dma_semaphore, #tpu.memory_space<semaphore_mem>>) src(%40 : memref<1x256xf32, #tpu.memory_space<any>>) dst(%42 : memref<1x256xf32, #tpu.memory_space<vmem>>)
    %c0_i32_27 = arith.constant 0 : i32
    %c0_i32_28 = arith.constant 0 : i32
    %45 = tpu.memref_slice %arg4[%c0_i32_27, %c0_i32_28] : memref<32x256xf32, #tpu.memory_space<any>> -> memref<1x256xf32, #tpu.memory_space<any>>
    %c6_i32 = arith.constant 6 : i32
    %c0_i32_29 = arith.constant 0 : i32
    %46 = tpu.memref_slice %arg6[%11, %c6_i32, %c0_i32_29] : memref<2x24x256xf32, #tpu.memory_space<vmem>> -> memref<1x1x256xf32, #tpu.memory_space<vmem>>
    %47 = tpu.memref_squeeze %46 : memref<1x1x256xf32, #tpu.memory_space<vmem>> -> memref<1x256xf32, #tpu.memory_space<vmem>>
    %48 = tpu.memref_slice %arg7[%11] : memref<2x!tpu.dma_semaphore, #tpu.memory_space<semaphore_mem>> -> memref<1x!tpu.dma_semaphore, #tpu.memory_space<semaphore_mem>>
    %49 = tpu.memref_squeeze %48 : memref<1x!tpu.dma_semaphore, #tpu.memory_space<semaphore_mem>> -> memref<!tpu.dma_semaphore, #tpu.memory_space<semaphore_mem>>
    tpu.wait_dma2 semaphore(%49 : memref<!tpu.dma_semaphore, #tpu.memory_space<semaphore_mem>>) src(%45 : memref<1x256xf32, #tpu.memory_space<any>>) dst(%47 : memref<1x256xf32, #tpu.memory_space<vmem>>)
    %c0_i32_30 = arith.constant 0 : i32
    %c0_i32_31 = arith.constant 0 : i32
    %50 = tpu.memref_slice %arg4[%c0_i32_30, %c0_i32_31] : memref<32x256xf32, #tpu.memory_space<any>> -> memref<1x256xf32, #tpu.memory_space<any>>
    %c7_i32 = arith.constant 7 : i32
    %c0_i32_32 = arith.constant 0 : i32
    %51 = tpu.memref_slice %arg6[%11, %c7_i32, %c0_i32_32] : memref<2x24x256xf32, #tpu.memory_space<vmem>> -> memref<1x1x256xf32, #tpu.memory_space<vmem>>
    %52 = tpu.memref_squeeze %51 : memref<1x1x256xf32, #tpu.memory_space<vmem>> -> memref<1x256xf32, #tpu.memory_space<vmem>>
    %53 = tpu.memref_slice %arg7[%11] : memref<2x!tpu.dma_semaphore, #tpu.memory_space<semaphore_mem>> -> memref<1x!tpu.dma_semaphore, #tpu.memory_space<semaphore_mem>>
    %54 = tpu.memref_squeeze %53 : memref<1x!tpu.dma_semaphore, #tpu.memory_space<semaphore_mem>> -> memref<!tpu.dma_semaphore, #tpu.memory_space<semaphore_mem>>
    tpu.wait_dma2 semaphore(%54 : memref<!tpu.dma_semaphore, #tpu.memory_space<semaphore_mem>>) src(%50 : memref<1x256xf32, #tpu.memory_space<any>>) dst(%52 : memref<1x256xf32, #tpu.memory_space<vmem>>)
    %c0_i32_33 = arith.constant 0 : i32
    %c0_i32_34 = arith.constant 0 : i32
    %55 = tpu.memref_slice %arg4[%c0_i32_33, %c0_i32_34] : memref<32x256xf32, #tpu.memory_space<any>> -> memref<1x256xf32, #tpu.memory_space<any>>
    %c8_i32 = arith.constant 8 : i32
    %c0_i32_35 = arith.constant 0 : i32
    %56 = tpu.memref_slice %arg6[%11, %c8_i32, %c0_i32_35] : memref<2x24x256xf32, #tpu.memory_space<vmem>> -> memref<1x1x256xf32, #tpu.memory_space<vmem>>
    %57 = tpu.memref_squeeze %56 : memref<1x1x256xf32, #tpu.memory_space<vmem>> -> memref<1x256xf32, #tpu.memory_space<vmem>>
    %58 = tpu.memref_slice %arg7[%11] : memref<2x!tpu.dma_semaphore, #tpu.memory_space<semaphore_mem>> -> memref<1x!tpu.dma_semaphore, #tpu.memory_space<semaphore_mem>>
    %59 = tpu.memref_squeeze %58 : memref<1x!tpu.dma_semaphore, #tpu.memory_space<semaphore_mem>> -> memref<!tpu.dma_semaphore, #tpu.memory_space<semaphore_mem>>
    tpu.wait_dma2 semaphore(%59 : memref<!tpu.dma_semaphore, #tpu.memory_space<semaphore_mem>>) src(%55 : memref<1x256xf32, #tpu.memory_space<any>>) dst(%57 : memref<1x256xf32, #tpu.memory_space<vmem>>)
    %c0_i32_36 = arith.constant 0 : i32
    %c0_i32_37 = arith.constant 0 : i32
    %60 = tpu.memref_slice %arg4[%c0_i32_36, %c0_i32_37] : memref<32x256xf32, #tpu.memory_space<any>> -> memref<1x256xf32, #tpu.memory_space<any>>
    %c9_i32 = arith.constant 9 : i32
    %c0_i32_38 = arith.constant 0 : i32
    %61 = tpu.memref_slice %arg6[%11, %c9_i32, %c0_i32_38] : memref<2x24x256xf32, #tpu.memory_space<vmem>> -> memref<1x1x256xf32, #tpu.memory_space<vmem>>
    %62 = tpu.memref_squeeze %61 : memref<1x1x256xf32, #tpu.memory_space<vmem>> -> memref<1x256xf32, #tpu.memory_space<vmem>>
    %63 = tpu.memref_slice %arg7[%11] : memref<2x!tpu.dma_semaphore, #tpu.memory_space<semaphore_mem>> -> memref<1x!tpu.dma_semaphore, #tpu.memory_space<semaphore_mem>>
    %64 = tpu.memref_squeeze %63 : memref<1x!tpu.dma_semaphore, #tpu.memory_space<semaphore_mem>> -> memref<!tpu.dma_semaphore, #tpu.memory_space<semaphore_mem>>
    tpu.wait_dma2 semaphore(%64 : memref<!tpu.dma_semaphore, #tpu.memory_space<semaphore_mem>>) src(%60 : memref<1x256xf32, #tpu.memory_space<any>>) dst(%62 : memref<1x256xf32, #tpu.memory_space<vmem>>)
    %c0_i32_39 = arith.constant 0 : i32
    %c0_i32_40 = arith.constant 0 : i32
    %65 = tpu.memref_slice %arg4[%c0_i32_39, %c0_i32_40] : memref<32x256xf32, #tpu.memory_space<any>> -> memref<1x256xf32, #tpu.memory_space<any>>
    %c10_i32 = arith.constant 10 : i32
    %c0_i32_41 = arith.constant 0 : i32
    %66 = tpu.memref_slice %arg6[%11, %c10_i32, %c0_i32_41] : memref<2x24x256xf32, #tpu.memory_space<vmem>> -> memref<1x1x256xf32, #tpu.memory_space<vmem>>
    %67 = tpu.memref_squeeze %66 : memref<1x1x256xf32, #tpu.memory_space<vmem>> -> memref<1x256xf32, #tpu.memory_space<vmem>>
    %68 = tpu.memref_slice %arg7[%11] : memref<2x!tpu.dma_semaphore, #tpu.memory_space<semaphore_mem>> -> memref<1x!tpu.dma_semaphore, #tpu.memory_space<semaphore_mem>>
    %69 = tpu.memref_squeeze %68 : memref<1x!tpu.dma_semaphore, #tpu.memory_space<semaphore_mem>> -> memref<!tpu.dma_semaphore, #tpu.memory_space<semaphore_mem>>
    tpu.wait_dma2 semaphore(%69 : memref<!tpu.dma_semaphore, #tpu.memory_space<semaphore_mem>>) src(%65 : memref<1x256xf32, #tpu.memory_space<any>>) dst(%67 : memref<1x256xf32, #tpu.memory_space<vmem>>)
    %c0_i32_42 = arith.constant 0 : i32
    %c0_i32_43 = arith.constant 0 : i32
    %70 = tpu.memref_slice %arg4[%c0_i32_42, %c0_i32_43] : memref<32x256xf32, #tpu.memory_space<any>> -> memref<1x256xf32, #tpu.memory_space<any>>
    %c11_i32 = arith.constant 11 : i32
    %c0_i32_44 = arith.constant 0 : i32
    %71 = tpu.memref_slice %arg6[%11, %c11_i32, %c0_i32_44] : memref<2x24x256xf32, #tpu.memory_space<vmem>> -> memref<1x1x256xf32, #tpu.memory_space<vmem>>
    %72 = tpu.memref_squeeze %71 : memref<1x1x256xf32, #tpu.memory_space<vmem>> -> memref<1x256xf32, #tpu.memory_space<vmem>>
    %73 = tpu.memref_slice %arg7[%11] : memref<2x!tpu.dma_semaphore, #tpu.memory_space<semaphore_mem>> -> memref<1x!tpu.dma_semaphore, #tpu.memory_space<semaphore_mem>>
    %74 = tpu.memref_squeeze %73 : memref<1x!tpu.dma_semaphore, #tpu.memory_space<semaphore_mem>> -> memref<!tpu.dma_semaphore, #tpu.memory_space<semaphore_mem>>
    tpu.wait_dma2 semaphore(%74 : memref<!tpu.dma_semaphore, #tpu.memory_space<semaphore_mem>>) src(%70 : memref<1x256xf32, #tpu.memory_space<any>>) dst(%72 : memref<1x256xf32, #tpu.memory_space<vmem>>)
    %c0_i32_45 = arith.constant 0 : i32
    %c0_i32_46 = arith.constant 0 : i32
    %75 = tpu.memref_slice %arg4[%c0_i32_45, %c0_i32_46] : memref<32x256xf32, #tpu.memory_space<any>> -> memref<1x256xf32, #tpu.memory_space<any>>
    %c12_i32 = arith.constant 12 : i32
    %c0_i32_47 = arith.constant 0 : i32
    %76 = tpu.memref_slice %arg6[%11, %c12_i32, %c0_i32_47] : memref<2x24x256xf32, #tpu.memory_space<vmem>> -> memref<1x1x256xf32, #tpu.memory_space<vmem>>
    %77 = tpu.memref_squeeze %76 : memref<1x1x256xf32, #tpu.memory_space<vmem>> -> memref<1x256xf32, #tpu.memory_space<vmem>>
    %78 = tpu.memref_slice %arg7[%11] : memref<2x!tpu.dma_semaphore, #tpu.memory_space<semaphore_mem>> -> memref<1x!tpu.dma_semaphore, #tpu.memory_space<semaphore_mem>>
    %79 = tpu.memref_squeeze %78 : memref<1x!tpu.dma_semaphore, #tpu.memory_space<semaphore_mem>> -> memref<!tpu.dma_semaphore, #tpu.memory_space<semaphore_mem>>
    tpu.wait_dma2 semaphore(%79 : memref<!tpu.dma_semaphore, #tpu.memory_space<semaphore_mem>>) src(%75 : memref<1x256xf32, #tpu.memory_space<any>>) dst(%77 : memref<1x256xf32, #tpu.memory_space<vmem>>)
    %c0_i32_48 = arith.constant 0 : i32
    %c0_i32_49 = arith.constant 0 : i32
    %80 = tpu.memref_slice %arg4[%c0_i32_48, %c0_i32_49] : memref<32x256xf32, #tpu.memory_space<any>> -> memref<1x256xf32, #tpu.memory_space<any>>
    %c13_i32 = arith.constant 13 : i32
    %c0_i32_50 = arith.constant 0 : i32
    %81 = tpu.memref_slice %arg6[%11, %c13_i32, %c0_i32_50] : memref<2x24x256xf32, #tpu.memory_space<vmem>> -> memref<1x1x256xf32, #tpu.memory_space<vmem>>
    %82 = tpu.memref_squeeze %81 : memref<1x1x256xf32, #tpu.memory_space<vmem>> -> memref<1x256xf32, #tpu.memory_space<vmem>>
    %83 = tpu.memref_slice %arg7[%11] : memref<2x!tpu.dma_semaphore, #tpu.memory_space<semaphore_mem>> -> memref<1x!tpu.dma_semaphore, #tpu.memory_space<semaphore_mem>>
    %84 = tpu.memref_squeeze %83 : memref<1x!tpu.dma_semaphore, #tpu.memory_space<semaphore_mem>> -> memref<!tpu.dma_semaphore, #tpu.memory_space<semaphore_mem>>
    tpu.wait_dma2 semaphore(%84 : memref<!tpu.dma_semaphore, #tpu.memory_space<semaphore_mem>>) src(%80 : memref<1x256xf32, #tpu.memory_space<any>>) dst(%82 : memref<1x256xf32, #tpu.memory_space<vmem>>)
    %c0_i32_51 = arith.constant 0 : i32
    %c0_i32_52 = arith.constant 0 : i32
    %85 = tpu.memref_slice %arg4[%c0_i32_51, %c0_i32_52] : memref<32x256xf32, #tpu.memory_space<any>> -> memref<1x256xf32, #tpu.memory_space<any>>
    %c14_i32 = arith.constant 14 : i32
    %c0_i32_53 = arith.constant 0 : i32
    %86 = tpu.memref_slice %arg6[%11, %c14_i32, %c0_i32_53] : memref<2x24x256xf32, #tpu.memory_space<vmem>> -> memref<1x1x256xf32, #tpu.memory_space<vmem>>
    %87 = tpu.memref_squeeze %86 : memref<1x1x256xf32, #tpu.memory_space<vmem>> -> memref<1x256xf32, #tpu.memory_space<vmem>>
    %88 = tpu.memref_slice %arg7[%11] : memref<2x!tpu.dma_semaphore, #tpu.memory_space<semaphore_mem>> -> memref<1x!tpu.dma_semaphore, #tpu.memory_space<semaphore_mem>>
    %89 = tpu.memref_squeeze %88 : memref<1x!tpu.dma_semaphore, #tpu.memory_space<semaphore_mem>> -> memref<!tpu.dma_semaphore, #tpu.memory_space<semaphore_mem>>
    tpu.wait_dma2 semaphore(%89 : memref<!tpu.dma_semaphore, #tpu.memory_space<semaphore_mem>>) src(%85 : memref<1x256xf32, #tpu.memory_space<any>>) dst(%87 : memref<1x256xf32, #tpu.memory_space<vmem>>)
    %c0_i32_54 = arith.constant 0 : i32
    %c0_i32_55 = arith.constant 0 : i32
    %90 = tpu.memref_slice %arg4[%c0_i32_54, %c0_i32_55] : memref<32x256xf32, #tpu.memory_space<any>> -> memref<1x256xf32, #tpu.memory_space<any>>
    %c15_i32 = arith.constant 15 : i32
    %c0_i32_56 = arith.constant 0 : i32
    %91 = tpu.memref_slice %arg6[%11, %c15_i32, %c0_i32_56] : memref<2x24x256xf32, #tpu.memory_space<vmem>> -> memref<1x1x256xf32, #tpu.memory_space<vmem>>
    %92 = tpu.memref_squeeze %91 : memref<1x1x256xf32, #tpu.memory_space<vmem>> -> memref<1x256xf32, #tpu.memory_space<vmem>>
    %93 = tpu.memref_slice %arg7[%11] : memref<2x!tpu.dma_semaphore, #tpu.memory_space<semaphore_mem>> -> memref<1x!tpu.dma_semaphore, #tpu.memory_space<semaphore_mem>>
    %94 = tpu.memref_squeeze %93 : memref<1x!tpu.dma_semaphore, #tpu.memory_space<semaphore_mem>> -> memref<!tpu.dma_semaphore, #tpu.memory_space<semaphore_mem>>
    tpu.wait_dma2 semaphore(%94 : memref<!tpu.dma_semaphore, #tpu.memory_space<semaphore_mem>>) src(%90 : memref<1x256xf32, #tpu.memory_space<any>>) dst(%92 : memref<1x256xf32, #tpu.memory_space<vmem>>)
    %c0_i32_57 = arith.constant 0 : i32
    %c0_i32_58 = arith.constant 0 : i32
    %95 = tpu.memref_slice %arg4[%c0_i32_57, %c0_i32_58] : memref<32x256xf32, #tpu.memory_space<any>> -> memref<1x256xf32, #tpu.memory_space<any>>
    %c16_i32 = arith.constant 16 : i32
    %c0_i32_59 = arith.constant 0 : i32
    %96 = tpu.memref_slice %arg6[%11, %c16_i32, %c0_i32_59] : memref<2x24x256xf32, #tpu.memory_space<vmem>> -> memref<1x1x256xf32, #tpu.memory_space<vmem>>
    %97 = tpu.memref_squeeze %96 : memref<1x1x256xf32, #tpu.memory_space<vmem>> -> memref<1x256xf32, #tpu.memory_space<vmem>>
    %98 = tpu.memref_slice %arg7[%11] : memref<2x!tpu.dma_semaphore, #tpu.memory_space<semaphore_mem>> -> memref<1x!tpu.dma_semaphore, #tpu.memory_space<semaphore_mem>>
    %99 = tpu.memref_squeeze %98 : memref<1x!tpu.dma_semaphore, #tpu.memory_space<semaphore_mem>> -> memref<!tpu.dma_semaphore, #tpu.memory_space<semaphore_mem>>
    tpu.wait_dma2 semaphore(%99 : memref<!tpu.dma_semaphore, #tpu.memory_space<semaphore_mem>>) src(%95 : memref<1x256xf32, #tpu.memory_space<any>>) dst(%97 : memref<1x256xf32, #tpu.memory_space<vmem>>)
    %c0_i32_60 = arith.constant 0 : i32
    %c0_i32_61 = arith.constant 0 : i32
    %100 = tpu.memref_slice %arg4[%c0_i32_60, %c0_i32_61] : memref<32x256xf32, #tpu.memory_space<any>> -> memref<1x256xf32, #tpu.memory_space<any>>
    %c17_i32 = arith.constant 17 : i32
    %c0_i32_62 = arith.constant 0 : i32
    %101 = tpu.memref_slice %arg6[%11, %c17_i32, %c0_i32_62] : memref<2x24x256xf32, #tpu.memory_space<vmem>> -> memref<1x1x256xf32, #tpu.memory_space<vmem>>
    %102 = tpu.memref_squeeze %101 : memref<1x1x256xf32, #tpu.memory_space<vmem>> -> memref<1x256xf32, #tpu.memory_space<vmem>>
    %103 = tpu.memref_slice %arg7[%11] : memref<2x!tpu.dma_semaphore, #tpu.memory_space<semaphore_mem>> -> memref<1x!tpu.dma_semaphore, #tpu.memory_space<semaphore_mem>>
    %104 = tpu.memref_squeeze %103 : memref<1x!tpu.dma_semaphore, #tpu.memory_space<semaphore_mem>> -> memref<!tpu.dma_semaphore, #tpu.memory_space<semaphore_mem>>
    tpu.wait_dma2 semaphore(%104 : memref<!tpu.dma_semaphore, #tpu.memory_space<semaphore_mem>>) src(%100 : memref<1x256xf32, #tpu.memory_space<any>>) dst(%102 : memref<1x256xf32, #tpu.memory_space<vmem>>)
    %c0_i32_63 = arith.constant 0 : i32
    %c0_i32_64 = arith.constant 0 : i32
    %105 = tpu.memref_slice %arg4[%c0_i32_63, %c0_i32_64] : memref<32x256xf32, #tpu.memory_space<any>> -> memref<1x256xf32, #tpu.memory_space<any>>
    %c18_i32 = arith.constant 18 : i32
    %c0_i32_65 = arith.constant 0 : i32
    %106 = tpu.memref_slice %arg6[%11, %c18_i32, %c0_i32_65] : memref<2x24x256xf32, #tpu.memory_space<vmem>> -> memref<1x1x256xf32, #tpu.memory_space<vmem>>
    %107 = tpu.memref_squeeze %106 : memref<1x1x256xf32, #tpu.memory_space<vmem>> -> memref<1x256xf32, #tpu.memory_space<vmem>>
    %108 = tpu.memref_slice %arg7[%11] : memref<2x!tpu.dma_semaphore, #tpu.memory_space<semaphore_mem>> -> memref<1x!tpu.dma_semaphore, #tpu.memory_space<semaphore_mem>>
    %109 = tpu.memref_squeeze %108 : memref<1x!tpu.dma_semaphore, #tpu.memory_space<semaphore_mem>> -> memref<!tpu.dma_semaphore, #tpu.memory_space<semaphore_mem>>
    tpu.wait_dma2 semaphore(%109 : memref<!tpu.dma_semaphore, #tpu.memory_space<semaphore_mem>>) src(%105 : memref<1x256xf32, #tpu.memory_space<any>>) dst(%107 : memref<1x256xf32, #tpu.memory_space<vmem>>)
    %c0_i32_66 = arith.constant 0 : i32
    %c0_i32_67 = arith.constant 0 : i32
    %110 = tpu.memref_slice %arg4[%c0_i32_66, %c0_i32_67] : memref<32x256xf32, #tpu.memory_space<any>> -> memref<1x256xf32, #tpu.memory_space<any>>
    %c19_i32 = arith.constant 19 : i32
    %c0_i32_68 = arith.constant 0 : i32
    %111 = tpu.memref_slice %arg6[%11, %c19_i32, %c0_i32_68] : memref<2x24x256xf32, #tpu.memory_space<vmem>> -> memref<1x1x256xf32, #tpu.memory_space<vmem>>
    %112 = tpu.memref_squeeze %111 : memref<1x1x256xf32, #tpu.memory_space<vmem>> -> memref<1x256xf32, #tpu.memory_space<vmem>>
    %113 = tpu.memref_slice %arg7[%11] : memref<2x!tpu.dma_semaphore, #tpu.memory_space<semaphore_mem>> -> memref<1x!tpu.dma_semaphore, #tpu.memory_space<semaphore_mem>>
    %114 = tpu.memref_squeeze %113 : memref<1x!tpu.dma_semaphore, #tpu.memory_space<semaphore_mem>> -> memref<!tpu.dma_semaphore, #tpu.memory_space<semaphore_mem>>
    tpu.wait_dma2 semaphore(%114 : memref<!tpu.dma_semaphore, #tpu.memory_space<semaphore_mem>>) src(%110 : memref<1x256xf32, #tpu.memory_space<any>>) dst(%112 : memref<1x256xf32, #tpu.memory_space<vmem>>)
    %c0_i32_69 = arith.constant 0 : i32
    %c0_i32_70 = arith.constant 0 : i32
    %115 = tpu.memref_slice %arg4[%c0_i32_69, %c0_i32_70] : memref<32x256xf32, #tpu.memory_space<any>> -> memref<1x256xf32, #tpu.memory_space<any>>
    %c20_i32 = arith.constant 20 : i32
    %c0_i32_71 = arith.constant 0 : i32
    %116 = tpu.memref_slice %arg6[%11, %c20_i32, %c0_i32_71] : memref<2x24x256xf32, #tpu.memory_space<vmem>> -> memref<1x1x256xf32, #tpu.memory_space<vmem>>
    %117 = tpu.memref_squeeze %116 : memref<1x1x256xf32, #tpu.memory_space<vmem>> -> memref<1x256xf32, #tpu.memory_space<vmem>>
    %118 = tpu.memref_slice %arg7[%11] : memref<2x!tpu.dma_semaphore, #tpu.memory_space<semaphore_mem>> -> memref<1x!tpu.dma_semaphore, #tpu.memory_space<semaphore_mem>>
    %119 = tpu.memref_squeeze %118 : memref<1x!tpu.dma_semaphore, #tpu.memory_space<semaphore_mem>> -> memref<!tpu.dma_semaphore, #tpu.memory_space<semaphore_mem>>
    tpu.wait_dma2 semaphore(%119 : memref<!tpu.dma_semaphore, #tpu.memory_space<semaphore_mem>>) src(%115 : memref<1x256xf32, #tpu.memory_space<any>>) dst(%117 : memref<1x256xf32, #tpu.memory_space<vmem>>)
    %c0_i32_72 = arith.constant 0 : i32
    %c0_i32_73 = arith.constant 0 : i32
    %120 = tpu.memref_slice %arg4[%c0_i32_72, %c0_i32_73] : memref<32x256xf32, #tpu.memory_space<any>> -> memref<1x256xf32, #tpu.memory_space<any>>
    %c21_i32 = arith.constant 21 : i32
    %c0_i32_74 = arith.constant 0 : i32
    %121 = tpu.memref_slice %arg6[%11, %c21_i32, %c0_i32_74] : memref<2x24x256xf32, #tpu.memory_space<vmem>> -> memref<1x1x256xf32, #tpu.memory_space<vmem>>
    %122 = tpu.memref_squeeze %121 : memref<1x1x256xf32, #tpu.memory_space<vmem>> -> memref<1x256xf32, #tpu.memory_space<vmem>>
    %123 = tpu.memref_slice %arg7[%11] : memref<2x!tpu.dma_semaphore, #tpu.memory_space<semaphore_mem>> -> memref<1x!tpu.dma_semaphore, #tpu.memory_space<semaphore_mem>>
    %124 = tpu.memref_squeeze %123 : memref<1x!tpu.dma_semaphore, #tpu.memory_space<semaphore_mem>> -> memref<!tpu.dma_semaphore, #tpu.memory_space<semaphore_mem>>
    tpu.wait_dma2 semaphore(%124 : memref<!tpu.dma_semaphore, #tpu.memory_space<semaphore_mem>>) src(%120 : memref<1x256xf32, #tpu.memory_space<any>>) dst(%122 : memref<1x256xf32, #tpu.memory_space<vmem>>)
    %c0_i32_75 = arith.constant 0 : i32
    %c0_i32_76 = arith.constant 0 : i32
    %125 = tpu.memref_slice %arg4[%c0_i32_75, %c0_i32_76] : memref<32x256xf32, #tpu.memory_space<any>> -> memref<1x256xf32, #tpu.memory_space<any>>
    %c22_i32 = arith.constant 22 : i32
    %c0_i32_77 = arith.constant 0 : i32
    %126 = tpu.memref_slice %arg6[%11, %c22_i32, %c0_i32_77] : memref<2x24x256xf32, #tpu.memory_space<vmem>> -> memref<1x1x256xf32, #tpu.memory_space<vmem>>
    %127 = tpu.memref_squeeze %126 : memref<1x1x256xf32, #tpu.memory_space<vmem>> -> memref<1x256xf32, #tpu.memory_space<vmem>>
    %128 = tpu.memref_slice %arg7[%11] : memref<2x!tpu.dma_semaphore, #tpu.memory_space<semaphore_mem>> -> memref<1x!tpu.dma_semaphore, #tpu.memory_space<semaphore_mem>>
    %129 = tpu.memref_squeeze %128 : memref<1x!tpu.dma_semaphore, #tpu.memory_space<semaphore_mem>> -> memref<!tpu.dma_semaphore, #tpu.memory_space<semaphore_mem>>
    tpu.wait_dma2 semaphore(%129 : memref<!tpu.dma_semaphore, #tpu.memory_space<semaphore_mem>>) src(%125 : memref<1x256xf32, #tpu.memory_space<any>>) dst(%127 : memref<1x256xf32, #tpu.memory_space<vmem>>)
    %c0_i32_78 = arith.constant 0 : i32
    %c0_i32_79 = arith.constant 0 : i32
    %130 = tpu.memref_slice %arg4[%c0_i32_78, %c0_i32_79] : memref<32x256xf32, #tpu.memory_space<any>> -> memref<1x256xf32, #tpu.memory_space<any>>
    %c23_i32 = arith.constant 23 : i32
    %c0_i32_80 = arith.constant 0 : i32
    %131 = tpu.memref_slice %arg6[%11, %c23_i32, %c0_i32_80] : memref<2x24x256xf32, #tpu.memory_space<vmem>> -> memref<1x1x256xf32, #tpu.memory_space<vmem>>
    %132 = tpu.memref_squeeze %131 : memref<1x1x256xf32, #tpu.memory_space<vmem>> -> memref<1x256xf32, #tpu.memory_space<vmem>>
    %133 = tpu.memref_slice %arg7[%11] : memref<2x!tpu.dma_semaphore, #tpu.memory_space<semaphore_mem>> -> memref<1x!tpu.dma_semaphore, #tpu.memory_space<semaphore_mem>>
    %134 = tpu.memref_squeeze %133 : memref<1x!tpu.dma_semaphore, #tpu.memory_space<semaphore_mem>> -> memref<!tpu.dma_semaphore, #tpu.memory_space<semaphore_mem>>
    tpu.wait_dma2 semaphore(%134 : memref<!tpu.dma_semaphore, #tpu.memory_space<semaphore_mem>>) src(%130 : memref<1x256xf32, #tpu.memory_space<any>>) dst(%132 : memref<1x256xf32, #tpu.memory_space<vmem>>)
    %c0 = arith.constant 0 : index
    %c0_81 = arith.constant 0 : index
    %135 = vector.load %arg3[%c0, %c0_81] : memref<24x256xf32, #tpu.memory_space<vmem>>, vector<8x128xf32>
    %c0_i32_82 = arith.constant 0 : i32
    %c0_i32_83 = arith.constant 0 : i32
    %136 = tpu.memref_slice %arg6[%11, %c0_i32_82, %c0_i32_83] : memref<2x24x256xf32, #tpu.memory_space<vmem>> -> memref<1x24x256xf32, #tpu.memory_space<vmem>>
    %137 = tpu.memref_squeeze %136 : memref<1x24x256xf32, #tpu.memory_space<vmem>> -> memref<24x256xf32, #tpu.memory_space<vmem>>
    %c0_84 = arith.constant 0 : index
    %c0_85 = arith.constant 0 : index
    %138 = vector.load %137[%c0_84, %c0_85] : memref<24x256xf32, #tpu.memory_space<vmem>>, vector<8x128xf32>
    %139 = arith.subf %135, %138 : vector<8x128xf32>
    %140 = arith.mulf %139, %139 : vector<8x128xf32>
    %c0_86 = arith.constant 0 : index
    %c128 = arith.constant 128 : index
    %141 = vector.load %arg3[%c0_86, %c128] : memref<24x256xf32, #tpu.memory_space<vmem>>, vector<8x128xf32>
    %c0_i32_87 = arith.constant 0 : i32
    %c0_i32_88 = arith.constant 0 : i32
    %142 = tpu.memref_slice %arg6[%11, %c0_i32_87, %c0_i32_88] : memref<2x24x256xf32, #tpu.memory_space<vmem>> -> memref<1x24x256xf32, #tpu.memory_space<vmem>>
    %143 = tpu.memref_squeeze %142 : memref<1x24x256xf32, #tpu.memory_space<vmem>> -> memref<24x256xf32, #tpu.memory_space<vmem>>
    %c0_89 = arith.constant 0 : index
    %c128_90 = arith.constant 128 : index
    %144 = vector.load %143[%c0_89, %c128_90] : memref<24x256xf32, #tpu.memory_space<vmem>>, vector<8x128xf32>
    %145 = arith.subf %141, %144 : vector<8x128xf32>
    %146 = arith.mulf %145, %145 : vector<8x128xf32>
    %147 = arith.addf %140, %146 : vector<8x128xf32>
    %c0_91 = arith.constant 0 : index
    %c0_92 = arith.constant 0 : index
    %148 = vector.load %arg5[%c0_91, %c0_92] : memref<24x128xf32, #tpu.memory_space<vmem>>, vector<8x128xf32>
    tpu.vector_store %arg5[%c0_91, %c0_92], %147 {strides = array<i32>} : memref<24x128xf32, #tpu.memory_space<vmem>>, vector<8x128xf32>,
    %c8 = arith.constant 8 : index
    %c0_93 = arith.constant 0 : index
    %149 = vector.load %arg3[%c8, %c0_93] : memref<24x256xf32, #tpu.memory_space<vmem>>, vector<8x128xf32>
    %c0_i32_94 = arith.constant 0 : i32
    %c0_i32_95 = arith.constant 0 : i32
    %150 = tpu.memref_slice %arg6[%11, %c0_i32_94, %c0_i32_95] : memref<2x24x256xf32, #tpu.memory_space<vmem>> -> memref<1x24x256xf32, #tpu.memory_space<vmem>>
    %151 = tpu.memref_squeeze %150 : memref<1x24x256xf32, #tpu.memory_space<vmem>> -> memref<24x256xf32, #tpu.memory_space<vmem>>
    %c8_96 = arith.constant 8 : index
    %c0_97 = arith.constant 0 : index
    %152 = vector.load %151[%c8_96, %c0_97] : memref<24x256xf32, #tpu.memory_space<vmem>>, vector<8x128xf32>
    %153 = arith.subf %149, %152 : vector<8x128xf32>
    %154 = arith.mulf %153, %153 : vector<8x128xf32>
    %c8_98 = arith.constant 8 : index
    %c128_99 = arith.constant 128 : index
    %155 = vector.load %arg3[%c8_98, %c128_99] : memref<24x256xf32, #tpu.memory_space<vmem>>, vector<8x128xf32>
    %c0_i32_100 = arith.constant 0 : i32
    %c0_i32_101 = arith.constant 0 : i32
    %156 = tpu.memref_slice %arg6[%11, %c0_i32_100, %c0_i32_101] : memref<2x24x256xf32, #tpu.memory_space<vmem>> -> memref<1x24x256xf32, #tpu.memory_space<vmem>>
    %157 = tpu.memref_squeeze %156 : memref<1x24x256xf32, #tpu.memory_space<vmem>> -> memref<24x256xf32, #tpu.memory_space<vmem>>
    %c8_102 = arith.constant 8 : index
    %c128_103 = arith.constant 128 : index
    %158 = vector.load %157[%c8_102, %c128_103] : memref<24x256xf32, #tpu.memory_space<vmem>>, vector<8x128xf32>
    %159 = arith.subf %155, %158 : vector<8x128xf32>
    %160 = arith.mulf %159, %159 : vector<8x128xf32>
    %161 = arith.addf %154, %160 : vector<8x128xf32>
    %c8_104 = arith.constant 8 : index
    %c0_105 = arith.constant 0 : index
    %162 = vector.load %arg5[%c8_104, %c0_105] : memref<24x128xf32, #tpu.memory_space<vmem>>, vector<8x128xf32>
    tpu.vector_store %arg5[%c8_104, %c0_105], %161 {strides = array<i32>} : memref<24x128xf32, #tpu.memory_space<vmem>>, vector<8x128xf32>,
    %c16 = arith.constant 16 : index
    %c0_106 = arith.constant 0 : index
    %163 = vector.load %arg3[%c16, %c0_106] : memref<24x256xf32, #tpu.memory_space<vmem>>, vector<8x128xf32>
    %c0_i32_107 = arith.constant 0 : i32
    %c0_i32_108 = arith.constant 0 : i32
    %164 = tpu.memref_slice %arg6[%11, %c0_i32_107, %c0_i32_108] : memref<2x24x256xf32, #tpu.memory_space<vmem>> -> memref<1x24x256xf32, #tpu.memory_space<vmem>>
    %165 = tpu.memref_squeeze %164 : memref<1x24x256xf32, #tpu.memory_space<vmem>> -> memref<24x256xf32, #tpu.memory_space<vmem>>
    %c16_109 = arith.constant 16 : index
    %c0_110 = arith.constant 0 : index
    %166 = vector.load %165[%c16_109, %c0_110] : memref<24x256xf32, #tpu.memory_space<vmem>>, vector<8x128xf32>
    %167 = arith.subf %163, %166 : vector<8x128xf32>
    %168 = arith.mulf %167, %167 : vector<8x128xf32>
    %c16_111 = arith.constant 16 : index
    %c128_112 = arith.constant 128 : index
    %169 = vector.load %arg3[%c16_111, %c128_112] : memref<24x256xf32, #tpu.memory_space<vmem>>, vector<8x128xf32>
    %c0_i32_113 = arith.constant 0 : i32
    %c0_i32_114 = arith.constant 0 : i32
    %170 = tpu.memref_slice %arg6[%11, %c0_i32_113, %c0_i32_114] : memref<2x24x256xf32, #tpu.memory_space<vmem>> -> memref<1x24x256xf32, #tpu.memory_space<vmem>>
    %171 = tpu.memref_squeeze %170 : memref<1x24x256xf32, #tpu.memory_space<vmem>> -> memref<24x256xf32, #tpu.memory_space<vmem>>
    %c16_115 = arith.constant 16 : index
    %c128_116 = arith.constant 128 : index
    %172 = vector.load %171[%c16_115, %c128_116] : memref<24x256xf32, #tpu.memory_space<vmem>>, vector<8x128xf32>
    %173 = arith.subf %169, %172 : vector<8x128xf32>
    %174 = arith.mulf %173, %173 : vector<8x128xf32>
    %175 = arith.addf %168, %174 : vector<8x128xf32>
    %c16_117 = arith.constant 16 : index
    %c0_118 = arith.constant 0 : index
    %176 = vector.load %arg5[%c16_117, %c0_118] : memref<24x128xf32, #tpu.memory_space<vmem>>, vector<8x128xf32>
    tpu.vector_store %arg5[%c16_117, %c0_118], %175 {strides = array<i32>} : memref<24x128xf32, #tpu.memory_space<vmem>>, vector<8x128xf32>,
    return
  }
  func.func @transform_0(%arg0: i32, %arg1: i32, %arg2: memref<24xi32, #tpu.memory_space<smem>>) -> (i32, i32) {
    %c1_i32 = arith.constant 1 : i32
    %0 = arith.muli %arg0, %c1_i32 : i32
    %1 = arith.addi %0, %arg1 : i32
    %c0_i32 = arith.constant 0 : i32
    %c0_i32_0 = arith.constant 0 : i32
    return %1, %c0_i32 : i32, i32
  }
  func.func @transform_2(%arg0: i32, %arg1: i32, %arg2: memref<24xi32, #tpu.memory_space<smem>>) -> (i32, i32) {
    %c1_i32 = arith.constant 1 : i32
    %0 = arith.muli %arg0, %c1_i32 : i32
    %1 = arith.addi %0, %arg1 : i32
    %c0_i32 = arith.constant 0 : i32
    %c0_i32_0 = arith.constant 0 : i32
    return %1, %c0_i32 : i32, i32
  }
}

</mosaic_0001>

<llo_original>
// kernel: center_loss.1
$region0: #{center_loss.1}
  #allocation0 [shape = 'u32[]', space=smem, size = 0x4, offset = 0x4, fixed_abs, tag = 'smem constant byte address 0x4 - core index']
  #allocation1 [shape = 'u32[144,128]{1,0:T(1,128)}', space=vmem, size = 0x12000, scoped, tag = 'internal scratch']
  #allocation2 [shape = 'f32[2,24,256]{2,1,0:T(8,128)}', space=vmem, size = 0xc000, scoped, tag = 'scratch operand']
  #allocation3 [shape = 's32[2]{0}', space=sflag, size = 0x8, scoped, tag = 'scratch operand']
  #allocation4 [shape = 's32[1]{0}', space=sflag, size = 0x4, scoped, tag = 'scoped memory for center_loss.1']
  #allocation5 [shape = 'u8[512]{0}', space=smem, size = 0x200, scoped, tag = 'prefetched SMEM operand 0']
  #allocation8 [shape = 's32[]', space=sflag, size = 0x4, offset = 0, fixed_abs, tag = 'sflag constant byte address 0x0 - dummy sync flag']
  #allocation9 [shape = 's32[]', space=sflag, size = 0x4, offset = 0, fixed_abs, tag = 'sflag constant byte address 0x0 - dummy sync flag']
  #allocation10 [shape = 's32[]', space=sflag, size = 0x4, offset = 0, fixed_abs, tag = 'sflag constant byte address 0x0 - dummy sync flag']
  #allocation11 [shape = 's32[]', space=sflag, size = 0x4, offset = 0, fixed_abs, tag = 'sflag constant byte address 0x0 - dummy sync flag']
  #allocation12 [shape = 's32[]', space=sflag, size = 0x4, offset = 0, fixed_abs, tag = 'sflag constant byte address 0x0 - dummy sync flag']
  #allocation13 [shape = 's32[]', space=sflag, size = 0x4, offset = 0, fixed_abs, tag = 'sflag constant byte address 0x0 - dummy sync flag']
  #allocation14 [shape = 's32[]', space=sflag, size = 0x4, offset = 0, fixed_abs, tag = 'sflag constant byte address 0x0 - dummy sync flag']
  #allocation15 [shape = 's32[]', space=sflag, size = 0x4, offset = 0, fixed_abs, tag = 'sflag constant byte address 0x0 - dummy sync flag']
  #allocation16 [shape = 's32[]', space=sflag, size = 0x4, offset = 0, fixed_abs, tag = 'sflag constant byte address 0x0 - dummy sync flag']
  #allocation17 [shape = 's32[]', space=sflag, size = 0x4, offset = 0, fixed_abs, tag = 'sflag constant byte address 0x0 - dummy sync flag']
  #allocation18 [shape = 's32[]', space=sflag, size = 0x4, offset = 0, fixed_abs, tag = 'sflag constant byte address 0x0 - dummy sync flag']
  #allocation19 [shape = 's32[]', space=sflag, size = 0x4, offset = 0, fixed_abs, tag = 'sflag constant byte address 0x0 - dummy sync flag']
  #allocation20 [shape = 's32[]', space=sflag, size = 0x4, offset = 0, fixed_abs, tag = 'sflag constant byte address 0x0 - dummy sync flag']
  #allocation21 [shape = 's32[]', space=sflag, size = 0x4, offset = 0, fixed_abs, tag = 'sflag constant byte address 0x0 - dummy sync flag']
  #allocation22 [shape = 's32[]', space=sflag, size = 0x4, offset = 0, fixed_abs, tag = 'sflag constant byte address 0x0 - dummy sync flag']
  #allocation23 [shape = 's32[]', space=sflag, size = 0x4, offset = 0, fixed_abs, tag = 'sflag constant byte address 0x0 - dummy sync flag']
  #allocation24 [shape = 's32[]', space=sflag, size = 0x4, offset = 0, fixed_abs, tag = 'sflag constant byte address 0x0 - dummy sync flag']
  #allocation25 [shape = 's32[]', space=sflag, size = 0x4, offset = 0, fixed_abs, tag = 'sflag constant byte address 0x0 - dummy sync flag']
  #allocation26 [shape = 's32[]', space=sflag, size = 0x4, offset = 0, fixed_abs, tag = 'sflag constant byte address 0x0 - dummy sync flag']
  #allocation27 [shape = 's32[]', space=sflag, size = 0x4, offset = 0, fixed_abs, tag = 'sflag constant byte address 0x0 - dummy sync flag']
  #allocation28 [shape = 's32[]', space=sflag, size = 0x4, offset = 0, fixed_abs, tag = 'sflag constant byte address 0x0 - dummy sync flag']
  #allocation29 [shape = 's32[]', space=sflag, size = 0x4, offset = 0, fixed_abs, tag = 'sflag constant byte address 0x0 - dummy sync flag']
  #allocation30 [shape = 's32[]', space=sflag, size = 0x4, offset = 0, fixed_abs, tag = 'sflag constant byte address 0x0 - dummy sync flag']
  #allocation31 [shape = 's32[]', space=sflag, size = 0x4, offset = 0, fixed_abs, tag = 'sflag constant byte address 0x0 - dummy sync flag']
  %s0 = inlined_call_operand.vmem [shape: s32[24], index: 0, kind: input, shape index: {}]
  %s1 = inlined_call_operand.hbm [shape: f32[24,256], index: 1, kind: input, shape index: {}]
  %s2 = inlined_call_operand.hbm [shape: f32[32,256], index: 2, kind: input, shape index: {}]
  %s3 = inlined_call_operand.vmem [shape: f32[24,128], index: 3, kind: output, shape index: {}]
  %s4 = sld [smem:[#allocation0]]
  $region22: #{center_loss.1} parent=0
    _
  %s6 = ssub.s32 1, %s4
  %s7 = scalar_select 0, %s6, %s4
  %s8 = sshll.u32 %s0, 4
  %s9 = int_to_ptr.vmem [resolvable:$true] %s8
  %11 = dma.vmem_to_smem %s9, 16, [#allocation5], [#allocation4]
  %12 = dma.done [#allocation4], 16
  %13 = sfence
  $region1: #{center_loss.1} parent=0
    #allocation6 [shape = 'u8[24576]{0}', space=vmem, size = 0x6000, scoped, tag = 'input window, operand 1, single buffered']
    #allocation7 [shape = 's32[1]{0}', space=sflag, size = 0x4, scoped, tag = 'scoped memory for center_loss.1']
    %14 = vsyncpa [#allocation7], 0
    // Predicated region
    $region2: #{center_loss.1} parent=1 // pred_check
      _
    $region3: #{center_loss.1} parent=1 // pred_check_branch
      %16 = sbr.rel (0) target = $region5
    $region4: #{center_loss.1} parent=1 // pred_region
      %s17 = sadd.s32 0, 0
      %s18 = smul.u32 3, %s17
      %s20 = ssub.s32 768, 768
      %21 = vsyncadd [#allocation7], %s20
      %s22 = smul.addr %s18, 2
      %s23 = smul.addr %s22, 128
      %s24 = scalar_lea.hbm %s1, %s23
      %s25 = sshll.u32 [#allocation6], 4
      %s26 = int_to_ptr.vmem [resolvable:$true] %s25
      %31 = dma.hbm_to_vmem [thread:$0]  %s24, 768, %s26, [#allocation7], 256, 256, 16
    $region5: #{center_loss.1} parent=1 // pred_fallthru
      _
    // Predicated region
    $region6: #{center_loss.1} parent=1 // pred_check
      _
    $region7: #{center_loss.1} parent=1 // pred_check_branch
      %33 = sbr.rel (0) target = $region9
    $region8: #{center_loss.1} parent=1 // pred_region
      %34 = dma.done [#allocation7], 768
    $region9: #{center_loss.1} parent=1 // pred_fallthru
      _
    %s35 = sadd.s32 0, 0
    %s36 = smul.u32 3, %s35
    %p37 = scmp.lt.s32.totalorder %s36, 2
    %s38 = scalar_select %p37, %s36, 2
    %s39 = smul.addr %s38, 8
    %s40 = scalar_lea.vmem %s3, %s39
    %s41 = sadd.s32 0, 0
    %s42 = smul.u32 3, %s41
    %s43 = sadd.s32 0, 0
    %s44 = smul.u32 3, %s43
    %p45 = scmp.lt.s32.totalorder %s44, 2
    %s46 = scalar_select %p45, %s44, 2
    %s47 = smul.addr %s46, 8
    %s48 = scalar_lea.vmem %s3, %s47
    %s49 = sadd.s32 0, 0
    %s50 = smul.u32 3, %s49
    %s51 = sadd.s32 0, 0
    %s52 = ssub.s32 0, 0
    %s53 = ssub.s32 0, 0
    %p54 = scmp.ne.s32.totalorder 0, 0
    %p55 = scmp.lt.s32.totalorder 0, 0
    %p56 = pnand %p55, %p54
    %p57 = pneg %p56
    %s58 = sadd.s32 0, 2
    %s59 = scalar_select %p57, %s58, 0
    %p60 = scmp.eq.s32.totalorder 0, 0
    // Predicated region
    $region10: #{center_loss.1} parent=1 // pred_check
      %p61 = pneg %p60
    $region11: #{center_loss.1} parent=1 // pred_check_branch
      %63 = sbr.rel (%p61) target = $region13
    $region12: #{center_loss.1} parent=1 // pred_region
      %s64 = smul.u32 %s51, 24
      %s65 = sld [smem:[#allocation5 + %s64]]
      %s66 = sshrl.u32 %s65, 3
      %s67 = sand.u32 %s65, 7
      %s68 = smul.u32 %s66, 16
      %s69 = sadd.s32 %s67, %s68
      %s70 = smul.addr %s69, 16
      %s71 = scalar_lea.hbm %s2, %s70
      %s73 = sshll.u32 [#allocation2], 4
      %s74 = int_to_ptr.vmem [resolvable:$true] %s73
      %76 = dma.hbm_to_vmem [thread:$0]  %s71, 32, %s74, [#allocation3], 128, 128, 1
      %s77 = sadd.s32 %s64, 1
      %s78 = sld [smem:[#allocation5 + %s77]]
      %s79 = sshrl.u32 %s78, 3
      %s80 = sand.u32 %s78, 7
      %s81 = smul.u32 %s79, 16
      %s82 = sadd.s32 %s80, %s81
      %s83 = smul.addr %s82, 16
      %s84 = scalar_lea.hbm %s2, %s83
      %s85 = scalar_lea.vmem [#allocation2], 1
      %s87 = sshll.u32 %s85, 4
      %s88 = int_to_ptr.vmem [resolvable:$true] %s87
      %90 = dma.hbm_to_vmem [thread:$0]  %s84, 32, %s88, [#allocation3], 128, 128, 1
      %s91 = sadd.s32 %s64, 2
      %s92 = sld [smem:[#allocation5 + %s91]]
      %s93 = sshrl.u32 %s92, 3
      %s94 = sand.u32 %s92, 7
      %s95 = smul.u32 %s93, 16
      %s96 = sadd.s32 %s94, %s95
      %s97 = smul.addr %s96, 16
      %s98 = scalar_lea.hbm %s2, %s97
      %s99 = scalar_lea.vmem [#allocation2], 2
      %s101 = sshll.u32 %s99, 4
      %s102 = int_to_ptr.vmem [resolvable:$true] %s101
      %104 = dma.hbm_to_vmem [thread:$0]  %s98, 32, %s102, [#allocation3], 128, 128, 1
      %s105 = sadd.s32 %s64, 3
      %s106 = sld [smem:[#allocation5 + %s105]]
      %s107 = sshrl.u32 %s106, 3
      %s108 = sand.u32 %s106, 7
      %s109 = smul.u32 %s107, 16
      %s110 = sadd.s32 %s108, %s109
      %s111 = smul.addr %s110, 16
      %s112 = scalar_lea.hbm %s2, %s111
      %s113 = scalar_lea.vmem [#allocation2], 3
      %s115 = sshll.u32 %s113, 4
      %s116 = int_to_ptr.vmem [resolvable:$true] %s115
      %118 = dma.hbm_to_vmem [thread:$0]  %s112, 32, %s116, [#allocation3], 128, 128, 1
      %s119 = sadd.s32 %s64, 4
      %s120 = sld [smem:[#allocation5 + %s119]]
      %s121 = sshrl.u32 %s120, 3
      %s122 = sand.u32 %s120, 7
      %s123 = smul.u32 %s121, 16
      %s124 = sadd.s32 %s122, %s123
      %s125 = smul.addr %s124, 16
      %s126 = scalar_lea.hbm %s2, %s125
      %s127 = scalar_lea.vmem [#allocation2], 4
      %s129 = sshll.u32 %s127, 4
      %s130 = int_to_ptr.vmem [resolvable:$true] %s129
      %132 = dma.hbm_to_vmem [thread:$0]  %s126, 32, %s130, [#allocation3], 128, 128, 1
      %s133 = sadd.s32 %s64, 5
      %s134 = sld [smem:[#allocation5 + %s133]]
      %s135 = sshrl.u32 %s134, 3
      %s136 = sand.u32 %s134, 7
      %s137 = smul.u32 %s135, 16
      %s138 = sadd.s32 %s136, %s137
      %s139 = smul.addr %s138, 16
      %s140 = scalar_lea.hbm %s2, %s139
      %s141 = scalar_lea.vmem [#allocation2], 5
      %s143 = sshll.u32 %s141, 4
      %s144 = int_to_ptr.vmem [resolvable:$true] %s143
      %146 = dma.hbm_to_vmem [thread:$0]  %s140, 32, %s144, [#allocation3], 128, 128, 1
      %s147 = sadd.s32 %s64, 6
      %s148 = sld [smem:[#allocation5 + %s147]]
      %s149 = sshrl.u32 %s148, 3
      %s150 = sand.u32 %s148, 7
      %s151 = smul.u32 %s149, 16
      %s152 = sadd.s32 %s150, %s151
      %s153 = smul.addr %s152, 16
      %s154 = scalar_lea.hbm %s2, %s153
      %s155 = scalar_lea.vmem [#allocation2], 6
      %s157 = sshll.u32 %s155, 4
      %s158 = int_to_ptr.vmem [resolvable:$true] %s157
      %160 = dma.hbm_to_vmem [thread:$0]  %s154, 32, %s158, [#allocation3], 128, 128, 1
      %s161 = sadd.s32 %s64, 7
      %s162 = sld [smem:[#allocation5 + %s161]]
      %s163 = sshrl.u32 %s162, 3
      %s164 = sand.u32 %s162, 7
      %s165 = smul.u32 %s163, 16
      %s166 = sadd.s32 %s164, %s165
      %s167 = smul.addr %s166, 16
      %s168 = scalar_lea.hbm %s2, %s167
      %s169 = scalar_lea.vmem [#allocation2], 7
      %s171 = sshll.u32 %s169, 4
      %s172 = int_to_ptr.vmem [resolvable:$true] %s171
      %174 = dma.hbm_to_vmem [thread:$0]  %s168, 32, %s172, [#allocation3], 128, 128, 1
      %s175 = sadd.s32 %s64, 8
      %s176 = sld [smem:[#allocation5 + %s175]]
      %s177 = sshrl.u32 %s176, 3
      %s178 = sand.u32 %s176, 7
      %s179 = smul.u32 %s177, 16
      %s180 = sadd.s32 %s178, %s179
      %s181 = smul.addr %s180, 16
      %s182 = scalar_lea.hbm %s2, %s181
      %s183 = scalar_lea.vmem [#allocation2], 16
      %s185 = sshll.u32 %s183, 4
      %s186 = int_to_ptr.vmem [resolvable:$true] %s185
      %188 = dma.hbm_to_vmem [thread:$0]  %s182, 32, %s186, [#allocation3], 128, 128, 1
      %s189 = sadd.s32 %s64, 9
      %s190 = sld [smem:[#allocation5 + %s189]]
      %s191 = sshrl.u32 %s190, 3
      %s192 = sand.u32 %s190, 7
      %s193 = smul.u32 %s191, 16
      %s194 = sadd.s32 %s192, %s193
      %s195 = smul.addr %s194, 16
      %s196 = scalar_lea.hbm %s2, %s195
      %s197 = scalar_lea.vmem [#allocation2], 17
      %s199 = sshll.u32 %s197, 4
      %s200 = int_to_ptr.vmem [resolvable:$true] %s199
      %202 = dma.hbm_to_vmem [thread:$0]  %s196, 32, %s200, [#allocation3], 128, 128, 1
      %s203 = sadd.s32 %s64, 10
      %s204 = sld [smem:[#allocation5 + %s203]]
      %s205 = sshrl.u32 %s204, 3
      %s206 = sand.u32 %s204, 7
      %s207 = smul.u32 %s205, 16
      %s208 = sadd.s32 %s206, %s207
      %s209 = smul.addr %s208, 16
      %s210 = scalar_lea.hbm %s2, %s209
      %s211 = scalar_lea.vmem [#allocation2], 18
      %s213 = sshll.u32 %s211, 4
      %s214 = int_to_ptr.vmem [resolvable:$true] %s213
      %216 = dma.hbm_to_vmem [thread:$0]  %s210, 32, %s214, [#allocation3], 128, 128, 1
      %s217 = sadd.s32 %s64, 11
      %s218 = sld [smem:[#allocation5 + %s217]]
      %s219 = sshrl.u32 %s218, 3
      %s220 = sand.u32 %s218, 7
      %s221 = smul.u32 %s219, 16
      %s222 = sadd.s32 %s220, %s221
      %s223 = smul.addr %s222, 16
      %s224 = scalar_lea.hbm %s2, %s223
      %s225 = scalar_lea.vmem [#allocation2], 19
      %s227 = sshll.u32 %s225, 4
      %s228 = int_to_ptr.vmem [resolvable:$true] %s227
      %230 = dma.hbm_to_vmem [thread:$0]  %s224, 32, %s228, [#allocation3], 128, 128, 1
      %s231 = sadd.s32 %s64, 12
      %s232 = sld [smem:[#allocation5 + %s231]]
      %s233 = sshrl.u32 %s232, 3
      %s234 = sand.u32 %s232, 7
      %s235 = smul.u32 %s233, 16
      %s236 = sadd.s32 %s234, %s235
      %s237 = smul.addr %s236, 16
      %s238 = scalar_lea.hbm %s2, %s237
      %s239 = scalar_lea.vmem [#allocation2], 20
      %s241 = sshll.u32 %s239, 4
      %s242 = int_to_ptr.vmem [resolvable:$true] %s241
      %244 = dma.hbm_to_vmem [thread:$0]  %s238, 32, %s242, [#allocation3], 128, 128, 1
      %s245 = sadd.s32 %s64, 13
      %s246 = sld [smem:[#allocation5 + %s245]]
      %s247 = sshrl.u32 %s246, 3
      %s248 = sand.u32 %s246, 7
      %s249 = smul.u32 %s247, 16
      %s250 = sadd.s32 %s248, %s249
      %s251 = smul.addr %s250, 16
      %s252 = scalar_lea.hbm %s2, %s251
      %s253 = scalar_lea.vmem [#allocation2], 21
      %s255 = sshll.u32 %s253, 4
      %s256 = int_to_ptr.vmem [resolvable:$true] %s255
      %258 = dma.hbm_to_vmem [thread:$0]  %s252, 32, %s256, [#allocation3], 128, 128, 1
      %s259 = sadd.s32 %s64, 14
      %s260 = sld [smem:[#allocation5 + %s259]]
      %s261 = sshrl.u32 %s260, 3
      %s262 = sand.u32 %s260, 7
      %s263 = smul.u32 %s261, 16
      %s264 = sadd.s32 %s262, %s263
      %s265 = smul.addr %s264, 16
      %s266 = scalar_lea.hbm %s2, %s265
      %s267 = scalar_lea.vmem [#allocation2], 22
      %s269 = sshll.u32 %s267, 4
      %s270 = int_to_ptr.vmem [resolvable:$true] %s269
      %272 = dma.hbm_to_vmem [thread:$0]  %s266, 32, %s270, [#allocation3], 128, 128, 1
      %s273 = sadd.s32 %s64, 15
      %s274 = sld [smem:[#allocation5 + %s273]]
      %s275 = sshrl.u32 %s274, 3
      %s276 = sand.u32 %s274, 7
      %s277 = smul.u32 %s275, 16
      %s278 = sadd.s32 %s276, %s277
      %s279 = smul.addr %s278, 16
      %s280 = scalar_lea.hbm %s2, %s279
      %s281 = scalar_lea.vmem [#allocation2], 23
      %s283 = sshll.u32 %s281, 4
      %s284 = int_to_ptr.vmem [resolvable:$true] %s283
      %286 = dma.hbm_to_vmem [thread:$0]  %s280, 32, %s284, [#allocation3], 128, 128, 1
      %s287 = sadd.s32 %s64, 16
      %s288 = sld [smem:[#allocation5 + %s287]]
      %s289 = sshrl.u32 %s288, 3
      %s290 = sand.u32 %s288, 7
      %s291 = smul.u32 %s289, 16
      %s292 = sadd.s32 %s290, %s291
      %s293 = smul.addr %s292, 16
      %s294 = scalar_lea.hbm %s2, %s293
      %s295 = scalar_lea.vmem [#allocation2], 32
      %s297 = sshll.u32 %s295, 4
      %s298 = int_to_ptr.vmem [resolvable:$true] %s297
      %300 = dma.hbm_to_vmem [thread:$0]  %s294, 32, %s298, [#allocation3], 128, 128, 1
      %s301 = sadd.s32 %s64, 17
      %s302 = sld [smem:[#allocation5 + %s301]]
      %s303 = sshrl.u32 %s302, 3
      %s304 = sand.u32 %s302, 7
      %s305 = smul.u32 %s303, 16
      %s306 = sadd.s32 %s304, %s305
      %s307 = smul.addr %s306, 16
      %s308 = scalar_lea.hbm %s2, %s307
      %s309 = scalar_lea.vmem [#allocation2], 33
      %s311 = sshll.u32 %s309, 4
      %s312 = int_to_ptr.vmem [resolvable:$true] %s311
      %314 = dma.hbm_to_vmem [thread:$0]  %s308, 32, %s312, [#allocation3], 128, 128, 1
      %s315 = sadd.s32 %s64, 18
      %s316 = sld [smem:[#allocation5 + %s315]]
      %s317 = sshrl.u32 %s316, 3
      %s318 = sand.u32 %s316, 7
      %s319 = smul.u32 %s317, 16
      %s320 = sadd.s32 %s318, %s319
      %s321 = smul.addr %s320, 16
      %s322 = scalar_lea.hbm %s2, %s321
      %s323 = scalar_lea.vmem [#allocation2], 34
      %s325 = sshll.u32 %s323, 4
      %s326 = int_to_ptr.vmem [resolvable:$true] %s325
      %328 = dma.hbm_to_vmem [thread:$0]  %s322, 32, %s326, [#allocation3], 128, 128, 1
      %s329 = sadd.s32 %s64, 19
      %s330 = sld [smem:[#allocation5 + %s329]]
      %s331 = sshrl.u32 %s330, 3
      %s332 = sand.u32 %s330, 7
      %s333 = smul.u32 %s331, 16
      %s334 = sadd.s32 %s332, %s333
      %s335 = smul.addr %s334, 16
      %s336 = scalar_lea.hbm %s2, %s335
      %s337 = scalar_lea.vmem [#allocation2], 35
      %s339 = sshll.u32 %s337, 4
      %s340 = int_to_ptr.vmem [resolvable:$true] %s339
      %342 = dma.hbm_to_vmem [thread:$0]  %s336, 32, %s340, [#allocation3], 128, 128, 1
      %s343 = sadd.s32 %s64, 20
      %s344 = sld [smem:[#allocation5 + %s343]]
      %s345 = sshrl.u32 %s344, 3
      %s346 = sand.u32 %s344, 7
      %s347 = smul.u32 %s345, 16
      %s348 = sadd.s32 %s346, %s347
      %s349 = smul.addr %s348, 16
      %s350 = scalar_lea.hbm %s2, %s349
      %s351 = scalar_lea.vmem [#allocation2], 36
      %s353 = sshll.u32 %s351, 4
      %s354 = int_to_ptr.vmem [resolvable:$true] %s353
      %356 = dma.hbm_to_vmem [thread:$0]  %s350, 32, %s354, [#allocation3], 128, 128, 1
      %s357 = sadd.s32 %s64, 21
      %s358 = sld [smem:[#allocation5 + %s357]]
      %s359 = sshrl.u32 %s358, 3
      %s360 = sand.u32 %s358, 7
      %s361 = smul.u32 %s359, 16
      %s362 = sadd.s32 %s360, %s361
      %s363 = smul.addr %s362, 16
      %s364 = scalar_lea.hbm %s2, %s363
      %s365 = scalar_lea.vmem [#allocation2], 37
      %s367 = sshll.u32 %s365, 4
      %s368 = int_to_ptr.vmem [resolvable:$true] %s367
      %370 = dma.hbm_to_vmem [thread:$0]  %s364, 32, %s368, [#allocation3], 128, 128, 1
      %s371 = sadd.s32 %s64, 22
      %s372 = sld [smem:[#allocation5 + %s371]]
      %s373 = sshrl.u32 %s372, 3
      %s374 = sand.u32 %s372, 7
      %s375 = smul.u32 %s373, 16
      %s376 = sadd.s32 %s374, %s375
      %s377 = smul.addr %s376, 16
      %s378 = scalar_lea.hbm %s2, %s377
      %s379 = scalar_lea.vmem [#allocation2], 38
      %s381 = sshll.u32 %s379, 4
      %s382 = int_to_ptr.vmem [resolvable:$true] %s381
      %384 = dma.hbm_to_vmem [thread:$0]  %s378, 32, %s382, [#allocation3], 128, 128, 1
      %s385 = sadd.s32 %s64, 23
      %s386 = sld [smem:[#allocation5 + %s385]]
      %s387 = sshrl.u32 %s386, 3
      %s388 = sand.u32 %s386, 7
      %s389 = smul.u32 %s387, 16
      %s390 = sadd.s32 %s388, %s389
      %s391 = smul.addr %s390, 16
      %s392 = scalar_lea.hbm %s2, %s391
      %s393 = scalar_lea.vmem [#allocation2], 39
      %s395 = sshll.u32 %s393, 4
      %s396 = int_to_ptr.vmem [resolvable:$true] %s395
      %398 = dma.hbm_to_vmem [thread:$0]  %s392, 32, %s396, [#allocation3], 128, 128, 1
    $region13: #{center_loss.1} parent=1 // pred_fallthru
      _
    %s399 = scalar_lea.sflag [#allocation3], %s59
    %s400 = smul.u32 1, 2
    %s401 = sshll.u32 %s400, 4
    %402 = dma.done %s399, %s401
    %s403 = sshll.u32 %s400, 4
    %404 = dma.done %s399, %s403
    %s405 = sshll.u32 %s400, 4
    %406 = dma.done %s399, %s405
    %s407 = sshll.u32 %s400, 4
    %408 = dma.done %s399, %s407
    %s409 = sshll.u32 %s400, 4
    %410 = dma.done %s399, %s409
    %s411 = sshll.u32 %s400, 4
    %412 = dma.done %s399, %s411
    %s413 = sshll.u32 %s400, 4
    %414 = dma.done %s399, %s413
    %s415 = sshll.u32 %s400, 4
    %416 = dma.done %s399, %s415
    %s417 = sshll.u32 %s400, 4
    %418 = dma.done %s399, %s417
    %s419 = sshll.u32 %s400, 4
    %420 = dma.done %s399, %s419
    %s421 = sshll.u32 %s400, 4
    %422 = dma.done %s399, %s421
    %s423 = sshll.u32 %s400, 4
    %424 = dma.done %s399, %s423
    %s425 = sshll.u32 %s400, 4
    %426 = dma.done %s399, %s425
    %s427 = sshll.u32 %s400, 4
    %428 = dma.done %s399, %s427
    %s429 = sshll.u32 %s400, 4
    %430 = dma.done %s399, %s429
    %s431 = sshll.u32 %s400, 4
    %432 = dma.done %s399, %s431
    %s433 = sshll.u32 %s400, 4
    %434 = dma.done %s399, %s433
    %s435 = sshll.u32 %s400, 4
    %436 = dma.done %s399, %s435
    %s437 = sshll.u32 %s400, 4
    %438 = dma.done %s399, %s437
    %s439 = sshll.u32 %s400, 4
    %440 = dma.done %s399, %s439
    %s441 = sshll.u32 %s400, 4
    %442 = dma.done %s399, %s441
    %s443 = sshll.u32 %s400, 4
    %444 = dma.done %s399, %s443
    %s445 = sshll.u32 %s400, 4
    %446 = dma.done %s399, %s445
    %s447 = sshll.u32 %s400, 4
    %448 = dma.done %s399, %s447
    %v449 = vld [vmem:[#allocation6] sm:$0xff]
    %s450 = smul.u32 %s59, 6
    %s451 = smul.addr %s450, 8
    %s452 = scalar_lea.vmem [#allocation2], %s451
    %v453 = vld [vmem:[%s452] sm:$0xff]
    %v454 = vsub.f32 %v449, %v453
    %v455 = vmul.f32 %v454, %v454
    %v456 = vld [vmem:[#allocation6 + $0x8] sm:$0xff]
    %v457 = vld [vmem:[%s452 + $0x8] sm:$0xff]
    %v458 = vsub.f32 %v456, %v457
    %v459 = vmul.f32 %v458, %v458
    %v460 = vadd.f32 %v455, %v459
    %461 = vst [vmem:[%s48] sm:$0xff] %v460
    %v462 = vld [vmem:[#allocation6 + $0x10] sm:$0xff]
    %v463 = vld [vmem:[%s452 + $0x10] sm:$0xff]
    %v464 = vsub.f32 %v462, %v463
    %v465 = vmul.f32 %v464, %v464
    %v466 = vld [vmem:[#allocation6 + $0x18] sm:$0xff]
    %v467 = vld [vmem:[%s452 + $0x18] sm:$0xff]
    %v468 = vsub.f32 %v466, %v467
    %v469 = vmul.f32 %v468, %v468
    %v470 = vadd.f32 %v465, %v469
    %471 = vst [vmem:[%s48 + $0x8] sm:$0xff] %v470
    %v472 = vld [vmem:[#allocation6 + $0x20] sm:$0xff]
    %v473 = vld [vmem:[%s452 + $0x20] sm:$0xff]
    %v474 = vsub.f32 %v472, %v473
    %v475 = vmul.f32 %v474, %v474
    %v476 = vld [vmem:[#allocation6 + $0x28] sm:$0xff]
    %v477 = vld [vmem:[%s452 + $0x28] sm:$0xff]
    %v478 = vsub.f32 %v476, %v477
    %v479 = vmul.f32 %v478, %v478
    %v480 = vadd.f32 %v475, %v479
    %481 = vst [vmem:[%s48 + $0x10] sm:$0xff] %v480
    %s482 = sadd.s32 0, 0
    %s483 = smul.u32 3, %s482
    %p484 = scmp.lt.s32.totalorder %s483, 2
    %s485 = scalar_select %p484, %s483, 2
    %s486 = smul.addr %s485, 8
    %s487 = scalar_lea.vmem %s3, %s486
    // Predicated region
    $region14: #{center_loss.1} parent=1 // pred_check
      _
    $region15: #{center_loss.1} parent=1 // pred_check_branch
      %489 = sbr.rel (0) target = $region17
    $region16: #{center_loss.1} parent=1 // pred_region
      %s490 = sadd.s32 0, 0
      %s491 = smul.u32 3, %s490
    $region17: #{center_loss.1} parent=1 // pred_fallthru
      _
    // Predicated region
    $region18: #{center_loss.1} parent=1 // pred_check
      _
    $region19: #{center_loss.1} parent=1 // pred_check_branch
      %493 = sbr.rel (0) target = $region21
    $region20: #{center_loss.1} parent=1 // pred_region
      %s494 = sadd.s32 0, 0
      %s495 = smul.u32 3, %s494
      %p496 = scmp.lt.s32.totalorder %s495, 2
      %s497 = scalar_select %p496, %s495, 2
      %s498 = smul.addr %s497, 8
      %s499 = scalar_lea.vmem %s3, %s498
    $region21: #{center_loss.1} parent=1 // pred_fallthru
      _
    %500 = vsyncpa [#allocation7], 1
  %501 = vsyncmov [#allocation3]
  %s502 = vpop.sfrf %501
  %p503 = scmp.eq.s32.totalorder %s502, 0
  %p504 = pneg %p503
  %506 = shalt.err (%p504)
  %s507 = scalar_lea.sflag [#allocation3], 1
  %508 = vsyncmov %s507
  %s509 = vpop.sfrf %508
  %p510 = scmp.eq.s32.totalorder %s509, 0
  %p511 = pneg %p510
  %513 = shalt.err (%p511)

</llo_original>
